<compile_context>
chip_gen: v7x
topology: tpu7x:2x2x1
jax: 0.10.0
libtpu: 0.0.40
codegen_flags: <defaults>
</compile_context>

<pallas_src>
import jax
import jax.numpy as jnp
from jax import lax
from jax.experimental import pallas as pl
from jax.experimental.pallas import tpu as pltpu


# ----------------------------------------------------------------------------
# Kernel
# ----------------------------------------------------------------------------
def _make_fused_tcn_kernel(K, layer_meta, T, block_b, c_pad, mxu_dtype):
    """layer_meta: tuple of (dilation, has_downsample) per TemporalBlock.

    T here is the (already 8-aligned) padded time length of one block.
    """
    n_rows = block_b * T

    def kernel(x_ref, *refs):
        o_ref = refs[-1]
        params = refs[:-1]

        # (block_b, T, c_pad) -> (block_b*T, c_pad): time on sublanes,
        # zero-padded channels on lanes.  Elementwise path stays f32.
        h = x_ref[...].reshape(n_rows, c_pad).astype(jnp.float32)

        # Lane-width-1 time index; per-shift masks broadcast over lanes
        # (cheap VPU compare, negligible vreg pressure).
        row_t = lax.broadcasted_iota(jnp.int32, (n_rows, 1), 0) % T

        def shifted_tap(a, s):
            # tap[t] = a[t - s], zero for t < s (per batch element: the roll
            # over the flattened batch*time axis is masked per-row via t mod T,
            # so cross-batch wraparound never leaks).  Cast to MXU dtype here,
            # before the concat, to halve the slab footprint.
            if s == 0:
                return a.astype(mxu_dtype)
            if s >= T:
                return jnp.zeros((n_rows, c_pad), mxu_dtype)
            rolled = pltpu.roll(a, s, axis=0)  # XLU sublane rotate, not MXU
            return jnp.where(row_t >= s, rolled, 0.0).astype(mxu_dtype)

        def conv_slab(inp, dil):
            # im2col over the K taps -> operand of a single wide MXU matmul.
            return jnp.concatenate(
                [shifted_tap(inp, (K - 1 - k) * dil) for k in range(K)],
                axis=1)  # (n_rows, K*c_pad), mxu_dtype

        idx = 0
        for dil, has_ds in layer_meta:
            w1, b1 = params[idx], params[idx + 1]
            w2, b2 = params[idx + 2], params[idx + 3]
            idx += 4

            # conv1 (and, when present, the fused 1x1 downsample residual).
            y1 = jnp.dot(conv_slab(h, dil), w1[...],
                         preferred_element_type=jnp.float32) + b1[...]
            if has_ds:
                a = jnp.maximum(y1[:, :c_pad], 0.0)   # relu1(conv1)
                res = y1[:, c_pad:]                    # downsample(h)
            else:
                a = jnp.maximum(y1, 0.0)
                res = h                                 # identity residual
            # TODO(synk): dropout treated as identity (inference semantics).

            # conv2 + relu2
            y2 = jnp.dot(conv_slab(a, dil), w2[...],
                         preferred_element_type=jnp.float32) + b2[...]
            out = jnp.maximum(y2, 0.0)

            h = jnp.maximum(out + res, 0.0)            # final block ReLU

        o_ref[...] = h.reshape(block_b, T, c_pad).astype(o_ref.dtype)

    return kernel


# ----------------------------------------------------------------------------
# Parameter re-layout (done once, outside the kernel)
# ----------------------------------------------------------------------------
def prepare_params(params, c_pad, K, mxu_dtype):
    """Fold torch Conv1d layouts into MXU-ready padded matrices.

    Per layer (always exactly 4 flat params):
      w1:  (K*c_pad, c_pad)   or, with downsample fused, (K*c_pad, 2*c_pad)
           where columns [c_pad, 2*c_pad) hold Wd on the zero-shift tap rows.
      b1:  (1, c_pad) or (1, 2*c_pad)
      w2:  (K*c_pad, c_pad)
      b2:  (1, c_pad)
    Padded lanes are exact zeros, so padded channels stay zero network-wide.
    """
    flat, meta = [], []
    for i, p in enumerate(params):
        dil = 2 ** i
        has_ds = p["wd"] is not None
        meta.append((dil, has_ds))

        def fold_conv(w):
            c_out, c_in, kk = w.shape
            wk = jnp.transpose(w, (2, 1, 0))  # (K, c_in, c_out)
            wk = jnp.pad(wk, ((0, 0), (0, c_pad - c_in), (0, c_pad - c_out)))
            return wk.reshape(kk * c_pad, c_pad)

        w1 = fold_conv(p["w1"])                                 # (K*c_pad, c_pad)
        b1 = jnp.pad(p["b1"], (0, c_pad - p["b1"].shape[0]))
        if has_ds:
            # Fuse the 1x1 downsample as extra output columns of conv1's RHS,
            # placed on the rows of the zero-shift tap (k = K-1).
            wd = jnp.transpose(p["wd"][:, :, 0], (1, 0))        # (c_in, c_out)
            ci, co = wd.shape
            wd = jnp.pad(wd, ((0, c_pad - ci), (0, c_pad - co)))
            wd_rows = jnp.zeros((K * c_pad, c_pad), jnp.float32)
            wd_rows = wd_rows.at[(K - 1) * c_pad:].set(wd)
            w1 = jnp.concatenate([w1, wd_rows], axis=1)         # (K*c_pad, 2*c_pad)
            b1 = jnp.concatenate([b1, jnp.pad(p["bd"], (0, c_pad - co))])
        flat.append(w1.astype(mxu_dtype))
        flat.append(b1.reshape(1, -1).astype(jnp.float32))
        flat.append(fold_conv(p["w2"]).astype(mxu_dtype))
        flat.append(jnp.pad(p["b2"], (0, c_pad - p["b2"].shape[0]))
                    .reshape(1, c_pad).astype(jnp.float32))
    return tuple(flat), tuple(meta)


# ----------------------------------------------------------------------------
# Wrapper
# ----------------------------------------------------------------------------
def _pick_block_b(B, t_pad, target_rows=512):
    """Largest block_b with block_b*t_pad >= target_rows (MXU M fill), capped
    so at least 2 grid steps remain (v7x dual-TensorCore sharding), and
    dividing B exactly."""
    bb = max(1, -(-target_rows // t_pad))          # ceil(target_rows / t_pad)
    bb = min(bb, B // 2) if B >= 2 else min(bb, B)
    bb = max(bb, 1)
    while B % bb:
        bb -= 1
    return bb


def _default_vmem_limit():
    """Generation-aware VMEM limit: large on v5e/v6e (128 MiB physical), with
    headroom left on v7x (64 MiB physical)."""
    mib = 1024 * 1024
    try:
        cap = int(pltpu.get_tpu_info().vmem_capacity_bytes)
    except Exception:
        cap = 64 * mib
    return int(min(max(cap - 16 * mib, 32 * mib), 100 * mib))


def temporal_conv_net(x_bct, params, kernel_size, *, block_b=None, c_pad=None,
                      mxu_dtype=jnp.bfloat16, vmem_limit_bytes=None,
                      channels_last_out=False):
    """Full TemporalConvNet forward.  Input in PyTorch layout [B, C, T].

    Output is [B, C, T] by default (PyTorch parity); pass
    channels_last_out=True to get [B, T, C] and skip the extra transpose pass.
    """
    B, c_in, T = x_bct.shape
    c_last = params[-1]["w1"].shape[0]
    if c_pad is None:
        max_c = max([c_in] + [p["w1"].shape[0] for p in params])
        c_pad = max(128, ((max_c + 127) // 128) * 128)  # lane-dense channels

    # Pad T to a multiple of 8 so in-kernel reshapes are layout-free.
    t_pad = ((T + 7) // 8) * 8
    if block_b is None:
        block_b = _pick_block_b(B, t_pad)
    assert B % block_b == 0, (B, block_b)
    if vmem_limit_bytes is None:
        vmem_limit_bytes = _default_vmem_limit()

    flat, meta = prepare_params(params, c_pad, kernel_size, mxu_dtype)

    # One-time boundary layout change: [B, C, T] -> [B, T_pad, Cpad] in bf16
    # (halves input DMA).  Inter-layer activations never touch HBM.
    x = jnp.transpose(x_bct, (0, 2, 1))
    x = jnp.pad(x, ((0, 0), (0, t_pad - T), (0, c_pad - c_in))).astype(mxu_dtype)

    kernel = _make_fused_tcn_kernel(kernel_size, meta, t_pad, block_b, c_pad,
                                    mxu_dtype)

    # Constant index_map => Pallas does not re-DMA the weights across grid steps.
    param_specs = [pl.BlockSpec(p.shape, lambda b: (0, 0)) for p in flat]

    out = pl.pallas_call(
        kernel,
        # bf16 output: halves HBM writeback and the double-buffered out block.
        out_shape=jax.ShapeDtypeStruct((B, t_pad, c_pad), mxu_dtype),
        grid=(B // block_b,),
        in_specs=[pl.BlockSpec((block_b, t_pad, c_pad), lambda b: (b, 0, 0))]
        + param_specs,
        out_specs=pl.BlockSpec((block_b, t_pad, c_pad), lambda b: (b, 0, 0)),
        compiler_params=pltpu.CompilerParams(
            dimension_semantics=("parallel",),
            vmem_limit_bytes=vmem_limit_bytes,
        ),
    )(x, *flat)

    # TODO(synk): for very long sequences, tile T with a (K-1)*max_dilation
    # causal halo carried in VMEM scratch across an "arbitrary" grid axis
    # instead of full-T blocks (keeps the working set fixed under v7x's 64 MiB
    # VMEM while preserving large M tiles).
    out = out[:, :T, :c_last].astype(x_bct.dtype)
    if channels_last_out:
        return out                                  # [B, T, C], no extra pass
    return jnp.transpose(out, (0, 2, 1))            # [B, C, T] (PyTorch parity)


# ----------------------------------------------------------------------------
# Synthetic parameters + pure-JAX reference
# ----------------------------------------------------------------------------
def init_params(key, num_inputs, num_channels, kernel_size):
    """Deterministic synthetic parameters, shapes matching TemporalConvNet.__init__."""
    params = []
    c_in = num_inputs
    for c_out in num_channels:
        key, k1, k2, k3, k4, k5, k6 = jax.random.split(key, 7)
        w1 = 0.01 * jax.random.normal(k1, (c_out, c_in, kernel_size), jnp.float32)
        w2 = 0.01 * jax.random.normal(k2, (c_out, c_out, kernel_size), jnp.float32)
        b1 = 0.01 * jax.random.normal(k3, (c_out,), jnp.float32)
        b2 = 0.01 * jax.random.normal(k4, (c_out,), jnp.float32)
        if c_in != c_out:
            wd = 0.01 * jax.random.normal(k5, (c_out, c_in, 1), jnp.float32)
            bd = 0.01 * jax.random.normal(k6, (c_out,), jnp.float32)
        else:
            wd, bd = None, None
        params.append(dict(w1=w1, b1=b1, w2=w2, b2=b2, wd=wd, bd=bd))
        c_in = c_out
    return params


def reference_forward(x_bct, params, kernel_size):
    """Pure-JAX f32 reference (lax.conv) mirroring the PyTorch semantics."""
    h = x_bct
    for i, p in enumerate(params):
        d = 2 ** i
        pad = (kernel_size - 1) * d

        def conv(inp, w, b, dil, lpad):
            y = lax.conv_general_dilated(
                inp, w, window_strides=(1,), padding=[(lpad, 0)],
                rhs_dilation=(dil,), dimension_numbers=("NCH", "OIH", "NCH"))
            return y + b[None, :, None]

        out = jnp.maximum(conv(h, p["w1"], p["b1"], d, pad), 0.0)
        out = jnp.maximum(conv(out, p["w2"], p["b2"], d, pad), 0.0)
        res = conv(h, p["wd"], p["bd"], 1, 0) if p["wd"] is not None else h
        h = jnp.maximum(out + res, 0.0)
    return h


if __name__ == "__main__":
    key = jax.random.PRNGKey(0)
    # Regression setup: block_b > 1 (B=4 -> block_b=2, 2 grid steps) and a
    # top dilation of 8 == T/2 to exercise the masked-roll causal invariant.
    B, num_inputs, T = 4, 4, 16
    num_channels = [8, 8, 16, 16]     # dilations 1, 2, 4, 8
    kernel_size = 2

    key, kx = jax.random.split(key)
    x = jax.random.normal(kx, (B, num_inputs, T), jnp.float32)  # [B, C, T]
    params = init_params(key, num_inputs, num_channels, kernel_size)

    out = jax.block_until_ready(temporal_conv_net(x, params, kernel_size))
    assert out.shape == (B, num_channels[-1], T), out.shape

    ref = reference_forward(x, params, kernel_size)
    # bf16 MXU operands / bf16 output store (f32 accumulation) -> relaxed tol.
    err = float(jnp.max(jnp.abs(out - ref)))
    assert jnp.allclose(out, ref, atol=2e-3, rtol=2e-2), err

    print("KERNEL_OK")
</pallas_src>

<mosaic_0001>
module attributes {stable_mosaic.version = 11 : i64} {
  func.func @kernel(%arg0: i32, %arg1: memref<2x16x128xbf16, #tpu.memory_space<vmem>>, %arg2: memref<256x256xbf16, #tpu.memory_space<vmem>>, %arg3: memref<1x256xf32, #tpu.memory_space<vmem>>, %arg4: memref<256x128xbf16, #tpu.memory_space<vmem>>, %arg5: memref<1x128xf32, #tpu.memory_space<vmem>>, %arg6: memref<256x128xbf16, #tpu.memory_space<vmem>>, %arg7: memref<1x128xf32, #tpu.memory_space<vmem>>, %arg8: memref<256x128xbf16, #tpu.memory_space<vmem>>, %arg9: memref<1x128xf32, #tpu.memory_space<vmem>>, %arg10: memref<256x256xbf16, #tpu.memory_space<vmem>>, %arg11: memref<1x256xf32, #tpu.memory_space<vmem>>, %arg12: memref<256x128xbf16, #tpu.memory_space<vmem>>, %arg13: memref<1x128xf32, #tpu.memory_space<vmem>>, %arg14: memref<256x128xbf16, #tpu.memory_space<vmem>>, %arg15: memref<1x128xf32, #tpu.memory_space<vmem>>, %arg16: memref<256x128xbf16, #tpu.memory_space<vmem>>, %arg17: memref<1x128xf32, #tpu.memory_space<vmem>>, %arg18: memref<2x16x128xbf16, #tpu.memory_space<vmem>>) attributes {dimension_semantics = [#tpu.dimension_semantics<parallel>], iteration_bounds = array<i64: 2>, scalar_prefetch = 0 : i64, scratch_operands = 0 : i64, tpu.core_type = #tpu.core_type<tc>, window_params = [{transform_indices = @transform_0, window_bounds = array<i64: 2, 16, 128>}, {pipeline_mode = #tpu.pipeline_mode<synchronous>, transform_indices = @transform_1, window_bounds = array<i64: 256, 256>}, {pipeline_mode = #tpu.pipeline_mode<synchronous>, transform_indices = @transform_2, window_bounds = array<i64: 1, 256>}, {pipeline_mode = #tpu.pipeline_mode<synchronous>, transform_indices = @transform_3, window_bounds = array<i64: 256, 128>}, {pipeline_mode = #tpu.pipeline_mode<synchronous>, transform_indices = @transform_4, window_bounds = array<i64: 1, 128>}, {pipeline_mode = #tpu.pipeline_mode<synchronous>, transform_indices = @transform_5, window_bounds = array<i64: 256, 128>}, {pipeline_mode = #tpu.pipeline_mode<synchronous>, transform_indices = @transform_6, window_bounds = array<i64: 1, 128>}, {pipeline_mode = #tpu.pipeline_mode<synchronous>, transform_indices = @transform_7, window_bounds = array<i64: 256, 128>}, {pipeline_mode = #tpu.pipeline_mode<synchronous>, transform_indices = @transform_8, window_bounds = array<i64: 1, 128>}, {pipeline_mode = #tpu.pipeline_mode<synchronous>, transform_indices = @transform_9, window_bounds = array<i64: 256, 256>}, {pipeline_mode = #tpu.pipeline_mode<synchronous>, transform_indices = @transform_10, window_bounds = array<i64: 1, 256>}, {pipeline_mode = #tpu.pipeline_mode<synchronous>, transform_indices = @transform_11, window_bounds = array<i64: 256, 128>}, {pipeline_mode = #tpu.pipeline_mode<synchronous>, transform_indices = @transform_12, window_bounds = array<i64: 1, 128>}, {pipeline_mode = #tpu.pipeline_mode<synchronous>, transform_indices = @transform_13, window_bounds = array<i64: 256, 128>}, {pipeline_mode = #tpu.pipeline_mode<synchronous>, transform_indices = @transform_14, window_bounds = array<i64: 1, 128>}, {pipeline_mode = #tpu.pipeline_mode<synchronous>, transform_indices = @transform_15, window_bounds = array<i64: 256, 128>}, {pipeline_mode = #tpu.pipeline_mode<synchronous>, transform_indices = @transform_16, window_bounds = array<i64: 1, 128>}, {transform_indices = @transform_17, window_bounds = array<i64: 2, 16, 128>}]} {
    %c0 = arith.constant 0 : index
    %c0_0 = arith.constant 0 : index
    %c0_1 = arith.constant 0 : index
    %0 = vector.load %arg1[%c0, %c0_0, %c0_1] : memref<2x16x128xbf16, #tpu.memory_space<vmem>>, vector<2x16x128xbf16>
    %1 = vector.shape_cast %0 : vector<2x16x128xbf16> to vector<32x128xbf16>
    %2 = arith.extf %1 : vector<32x128xbf16> to vector<32x128xf32>
    %3 = tpu.iota {dimensions = array<i32: 0>} : vector<32x1xi32>
    %c16_i32 = arith.constant 16 : i32
    %c0_i32 = arith.constant 0 : i32
    %4 = arith.cmpi eq, %c16_i32, %c0_i32 : i32
    %c1_i32 = arith.constant 1 : i32
    %5 = arith.select %4, %c1_i32, %c16_i32 : i32
    %6 = vector.broadcast %5 : i32 to vector<32x1xi32>
    %7 = arith.remsi %3, %6 : vector<32x1xi32>
    %c0_i32_2 = arith.constant 0 : i32
    %8 = vector.broadcast %c0_i32_2 : i32 to vector<32x1xi32>
    %9 = arith.cmpi ne, %7, %8 : vector<32x1xi32>
    %c0_i32_3 = arith.constant 0 : i32
    %10 = vector.broadcast %c0_i32_3 : i32 to vector<32x1xi32>
    %11 = arith.cmpi slt, %7, %10 : vector<32x1xi32>
    %c0_i32_4 = arith.constant 0 : i32
    %12 = arith.cmpi slt, %5, %c0_i32_4 : i32
    %13 = vector.broadcast %12 : i1 to vector<32x1xi1>
    %14 = vector.broadcast %13 : vector<32x1xi1> to vector<32x1xi1>
    %15 = arith.xori %11, %14 : vector<32x1xi1>
    %16 = arith.andi %15, %9 : vector<32x1xi1>
    %17 = vector.broadcast %5 : i32 to vector<32x1xi32>
    %18 = arith.addi %7, %17 : vector<32x1xi32>
    %19 = arith.select %16, %18, %7 : vector<32x1xi1>, vector<32x1xi32>
    %c1_i32_5 = arith.constant 1 : i32
    %20 = tpu.dynamic_rotate %2 by %c1_i32_5 dim 0 : vector<32x128xf32>, i32 -> vector<32x128xf32>
    %c1_i32_6 = arith.constant 1 : i32
    %21 = vector.broadcast %c1_i32_6 : i32 to vector<32x1xi32>
    %22 = arith.cmpi sge, %19, %21 : vector<32x1xi32>
    %cst = arith.constant 0.000000e+00 : f32
    %23 = vector.shape_cast %22 : vector<32x1xi1> to vector<32x1xi1>
    %24 = vector.broadcast %23 : vector<32x1xi1> to vector<32x128xi1>
    %25 = vector.broadcast %cst : f32 to vector<32x128xf32>
    %26 = arith.select %24, %20, %25 : vector<32x128xi1>, vector<32x128xf32>
    %27 = arith.truncf %26 : vector<32x128xf32> to vector<32x128xbf16>
    %28 = arith.truncf %2 : vector<32x128xf32> to vector<32x128xbf16>
    %29 = tpu.concatenate %27, %28 in 1 : vector<32x128xbf16>, vector<32x128xbf16> -> vector<32x256xbf16>
    %c0_7 = arith.constant 0 : index
    %c0_8 = arith.constant 0 : index
    %30 = vector.load %arg2[%c0_7, %c0_8] : memref<256x256xbf16, #tpu.memory_space<vmem>>, vector<256x256xbf16>
    %cst_9 = arith.constant dense<0.000000e+00> : vector<32x256xf32>
    %31 = tpu.matmul %29, %30, %cst_9 {dimension_numbers = #tpu.dot_dimension_numbers<[1], [0], [0], [1], [0, 0, 1, 1], [], []>} : vector<32x256xbf16>, vector<256x256xbf16>, vector<32x256xf32> -> vector<32x256xf32>
    %c0_10 = arith.constant 0 : index
    %c0_11 = arith.constant 0 : index
    %32 = vector.load %arg3[%c0_10, %c0_11] : memref<1x256xf32, #tpu.memory_space<vmem>>, vector<1x256xf32>
    %33 = vector.broadcast %32 : vector<1x256xf32> to vector<32x256xf32>
    %34 = arith.addf %31, %33 : vector<32x256xf32>
    %35 = vector.extract_strided_slice %34 {offsets = [0, 0], sizes = [32, 128], strides = [1, 1]} : vector<32x256xf32> to vector<32x128xf32>
    %cst_12 = arith.constant 0.000000e+00 : f32
    %36 = vector.broadcast %cst_12 : f32 to vector<32x128xf32>
    %37 = arith.maximumf %35, %36 : vector<32x128xf32>
    %38 = vector.extract_strided_slice %34 {offsets = [0, 128], sizes = [32, 128], strides = [1, 1]} : vector<32x256xf32> to vector<32x128xf32>
    %c1_i32_13 = arith.constant 1 : i32
    %39 = tpu.dynamic_rotate %37 by %c1_i32_13 dim 0 : vector<32x128xf32>, i32 -> vector<32x128xf32>
    %c1_i32_14 = arith.constant 1 : i32
    %40 = vector.broadcast %c1_i32_14 : i32 to vector<32x1xi32>
    %41 = arith.cmpi sge, %19, %40 : vector<32x1xi32>
    %cst_15 = arith.constant 0.000000e+00 : f32
    %42 = vector.shape_cast %41 : vector<32x1xi1> to vector<32x1xi1>
    %43 = vector.broadcast %42 : vector<32x1xi1> to vector<32x128xi1>
    %44 = vector.broadcast %cst_15 : f32 to vector<32x128xf32>
    %45 = arith.select %43, %39, %44 : vector<32x128xi1>, vector<32x128xf32>
    %46 = arith.truncf %45 : vector<32x128xf32> to vector<32x128xbf16>
    %47 = arith.truncf %37 : vector<32x128xf32> to vector<32x128xbf16>
    %48 = tpu.concatenate %46, %47 in 1 : vector<32x128xbf16>, vector<32x128xbf16> -> vector<32x256xbf16>
    %c0_16 = arith.constant 0 : index
    %c0_17 = arith.constant 0 : index
    %49 = vector.load %arg4[%c0_16, %c0_17] : memref<256x128xbf16, #tpu.memory_space<vmem>>, vector<256x128xbf16>
    %cst_18 = arith.constant dense<0.000000e+00> : vector<32x128xf32>
    %50 = tpu.matmul %48, %49, %cst_18 {dimension_numbers = #tpu.dot_dimension_numbers<[1], [0], [0], [1], [0, 0, 1, 1], [], []>} : vector<32x256xbf16>, vector<256x128xbf16>, vector<32x128xf32> -> vector<32x128xf32>
    %c0_19 = arith.constant 0 : index
    %c0_20 = arith.constant 0 : index
    %51 = vector.load %arg5[%c0_19, %c0_20] : memref<1x128xf32, #tpu.memory_space<vmem>>, vector<1x128xf32>
    %52 = vector.broadcast %51 : vector<1x128xf32> to vector<32x128xf32>
    %53 = arith.addf %50, %52 : vector<32x128xf32>
    %cst_21 = arith.constant 0.000000e+00 : f32
    %54 = vector.broadcast %cst_21 : f32 to vector<32x128xf32>
    %55 = arith.maximumf %53, %54 : vector<32x128xf32>
    %56 = arith.addf %55, %38 : vector<32x128xf32>
    %cst_22 = arith.constant 0.000000e+00 : f32
    %57 = vector.broadcast %cst_22 : f32 to vector<32x128xf32>
    %58 = arith.maximumf %56, %57 : vector<32x128xf32>
    %c2_i32 = arith.constant 2 : i32
    %59 = tpu.dynamic_rotate %58 by %c2_i32 dim 0 : vector<32x128xf32>, i32 -> vector<32x128xf32>
    %c2_i32_23 = arith.constant 2 : i32
    %60 = vector.broadcast %c2_i32_23 : i32 to vector<32x1xi32>
    %61 = arith.cmpi sge, %19, %60 : vector<32x1xi32>
    %cst_24 = arith.constant 0.000000e+00 : f32
    %62 = vector.shape_cast %61 : vector<32x1xi1> to vector<32x1xi1>
    %63 = vector.broadcast %62 : vector<32x1xi1> to vector<32x128xi1>
    %64 = vector.broadcast %cst_24 : f32 to vector<32x128xf32>
    %65 = arith.select %63, %59, %64 : vector<32x128xi1>, vector<32x128xf32>
    %66 = arith.truncf %65 : vector<32x128xf32> to vector<32x128xbf16>
    %67 = arith.truncf %58 : vector<32x128xf32> to vector<32x128xbf16>
    %68 = tpu.concatenate %66, %67 in 1 : vector<32x128xbf16>, vector<32x128xbf16> -> vector<32x256xbf16>
    %c0_25 = arith.constant 0 : index
    %c0_26 = arith.constant 0 : index
    %69 = vector.load %arg6[%c0_25, %c0_26] : memref<256x128xbf16, #tpu.memory_space<vmem>>, vector<256x128xbf16>
    %cst_27 = arith.constant dense<0.000000e+00> : vector<32x128xf32>
    %70 = tpu.matmul %68, %69, %cst_27 {dimension_numbers = #tpu.dot_dimension_numbers<[1], [0], [0], [1], [0, 0, 1, 1], [], []>} : vector<32x256xbf16>, vector<256x128xbf16>, vector<32x128xf32> -> vector<32x128xf32>
    %c0_28 = arith.constant 0 : index
    %c0_29 = arith.constant 0 : index
    %71 = vector.load %arg7[%c0_28, %c0_29] : memref<1x128xf32, #tpu.memory_space<vmem>>, vector<1x128xf32>
    %72 = vector.broadcast %71 : vector<1x128xf32> to vector<32x128xf32>
    %73 = arith.addf %70, %72 : vector<32x128xf32>
    %cst_30 = arith.constant 0.000000e+00 : f32
    %74 = vector.broadcast %cst_30 : f32 to vector<32x128xf32>
    %75 = arith.maximumf %73, %74 : vector<32x128xf32>
    %c2_i32_31 = arith.constant 2 : i32
    %76 = tpu.dynamic_rotate %75 by %c2_i32_31 dim 0 : vector<32x128xf32>, i32 -> vector<32x128xf32>
    %c2_i32_32 = arith.constant 2 : i32
    %77 = vector.broadcast %c2_i32_32 : i32 to vector<32x1xi32>
    %78 = arith.cmpi sge, %19, %77 : vector<32x1xi32>
    %cst_33 = arith.constant 0.000000e+00 : f32
    %79 = vector.shape_cast %78 : vector<32x1xi1> to vector<32x1xi1>
    %80 = vector.broadcast %79 : vector<32x1xi1> to vector<32x128xi1>
    %81 = vector.broadcast %cst_33 : f32 to vector<32x128xf32>
    %82 = arith.select %80, %76, %81 : vector<32x128xi1>, vector<32x128xf32>
    %83 = arith.truncf %82 : vector<32x128xf32> to vector<32x128xbf16>
    %84 = arith.truncf %75 : vector<32x128xf32> to vector<32x128xbf16>
    %85 = tpu.concatenate %83, %84 in 1 : vector<32x128xbf16>, vector<32x128xbf16> -> vector<32x256xbf16>
    %c0_34 = arith.constant 0 : index
    %c0_35 = arith.constant 0 : index
    %86 = vector.load %arg8[%c0_34, %c0_35] : memref<256x128xbf16, #tpu.memory_space<vmem>>, vector<256x128xbf16>
    %cst_36 = arith.constant dense<0.000000e+00> : vector<32x128xf32>
    %87 = tpu.matmul %85, %86, %cst_36 {dimension_numbers = #tpu.dot_dimension_numbers<[1], [0], [0], [1], [0, 0, 1, 1], [], []>} : vector<32x256xbf16>, vector<256x128xbf16>, vector<32x128xf32> -> vector<32x128xf32>
    %c0_37 = arith.constant 0 : index
    %c0_38 = arith.constant 0 : index
    %88 = vector.load %arg9[%c0_37, %c0_38] : memref<1x128xf32, #tpu.memory_space<vmem>>, vector<1x128xf32>
    %89 = vector.broadcast %88 : vector<1x128xf32> to vector<32x128xf32>
    %90 = arith.addf %87, %89 : vector<32x128xf32>
    %cst_39 = arith.constant 0.000000e+00 : f32
    %91 = vector.broadcast %cst_39 : f32 to vector<32x128xf32>
    %92 = arith.maximumf %90, %91 : vector<32x128xf32>
    %93 = arith.addf %92, %58 : vector<32x128xf32>
    %cst_40 = arith.constant 0.000000e+00 : f32
    %94 = vector.broadcast %cst_40 : f32 to vector<32x128xf32>
    %95 = arith.maximumf %93, %94 : vector<32x128xf32>
    %c4_i32 = arith.constant 4 : i32
    %96 = tpu.dynamic_rotate %95 by %c4_i32 dim 0 : vector<32x128xf32>, i32 -> vector<32x128xf32>
    %c4_i32_41 = arith.constant 4 : i32
    %97 = vector.broadcast %c4_i32_41 : i32 to vector<32x1xi32>
    %98 = arith.cmpi sge, %19, %97 : vector<32x1xi32>
    %cst_42 = arith.constant 0.000000e+00 : f32
    %99 = vector.shape_cast %98 : vector<32x1xi1> to vector<32x1xi1>
    %100 = vector.broadcast %99 : vector<32x1xi1> to vector<32x128xi1>
    %101 = vector.broadcast %cst_42 : f32 to vector<32x128xf32>
    %102 = arith.select %100, %96, %101 : vector<32x128xi1>, vector<32x128xf32>
    %103 = arith.truncf %102 : vector<32x128xf32> to vector<32x128xbf16>
    %104 = arith.truncf %95 : vector<32x128xf32> to vector<32x128xbf16>
    %105 = tpu.concatenate %103, %104 in 1 : vector<32x128xbf16>, vector<32x128xbf16> -> vector<32x256xbf16>
    %c0_43 = arith.constant 0 : index
    %c0_44 = arith.constant 0 : index
    %106 = vector.load %arg10[%c0_43, %c0_44] : memref<256x256xbf16, #tpu.memory_space<vmem>>, vector<256x256xbf16>
    %cst_45 = arith.constant dense<0.000000e+00> : vector<32x256xf32>
    %107 = tpu.matmul %105, %106, %cst_45 {dimension_numbers = #tpu.dot_dimension_numbers<[1], [0], [0], [1], [0, 0, 1, 1], [], []>} : vector<32x256xbf16>, vector<256x256xbf16>, vector<32x256xf32> -> vector<32x256xf32>
    %c0_46 = arith.constant 0 : index
    %c0_47 = arith.constant 0 : index
    %108 = vector.load %arg11[%c0_46, %c0_47] : memref<1x256xf32, #tpu.memory_space<vmem>>, vector<1x256xf32>
    %109 = vector.broadcast %108 : vector<1x256xf32> to vector<32x256xf32>
    %110 = arith.addf %107, %109 : vector<32x256xf32>
    %111 = vector.extract_strided_slice %110 {offsets = [0, 0], sizes = [32, 128], strides = [1, 1]} : vector<32x256xf32> to vector<32x128xf32>
    %cst_48 = arith.constant 0.000000e+00 : f32
    %112 = vector.broadcast %cst_48 : f32 to vector<32x128xf32>
    %113 = arith.maximumf %111, %112 : vector<32x128xf32>
    %114 = vector.extract_strided_slice %110 {offsets = [0, 128], sizes = [32, 128], strides = [1, 1]} : vector<32x256xf32> to vector<32x128xf32>
    %c4_i32_49 = arith.constant 4 : i32
    %115 = tpu.dynamic_rotate %113 by %c4_i32_49 dim 0 : vector<32x128xf32>, i32 -> vector<32x128xf32>
    %c4_i32_50 = arith.constant 4 : i32
    %116 = vector.broadcast %c4_i32_50 : i32 to vector<32x1xi32>
    %117 = arith.cmpi sge, %19, %116 : vector<32x1xi32>
    %cst_51 = arith.constant 0.000000e+00 : f32
    %118 = vector.shape_cast %117 : vector<32x1xi1> to vector<32x1xi1>
    %119 = vector.broadcast %118 : vector<32x1xi1> to vector<32x128xi1>
    %120 = vector.broadcast %cst_51 : f32 to vector<32x128xf32>
    %121 = arith.select %119, %115, %120 : vector<32x128xi1>, vector<32x128xf32>
    %122 = arith.truncf %121 : vector<32x128xf32> to vector<32x128xbf16>
    %123 = arith.truncf %113 : vector<32x128xf32> to vector<32x128xbf16>
    %124 = tpu.concatenate %122, %123 in 1 : vector<32x128xbf16>, vector<32x128xbf16> -> vector<32x256xbf16>
    %c0_52 = arith.constant 0 : index
    %c0_53 = arith.constant 0 : index
    %125 = vector.load %arg12[%c0_52, %c0_53] : memref<256x128xbf16, #tpu.memory_space<vmem>>, vector<256x128xbf16>
    %cst_54 = arith.constant dense<0.000000e+00> : vector<32x128xf32>
    %126 = tpu.matmul %124, %125, %cst_54 {dimension_numbers = #tpu.dot_dimension_numbers<[1], [0], [0], [1], [0, 0, 1, 1], [], []>} : vector<32x256xbf16>, vector<256x128xbf16>, vector<32x128xf32> -> vector<32x128xf32>
    %c0_55 = arith.constant 0 : index
    %c0_56 = arith.constant 0 : index
    %127 = vector.load %arg13[%c0_55, %c0_56] : memref<1x128xf32, #tpu.memory_space<vmem>>, vector<1x128xf32>
    %128 = vector.broadcast %127 : vector<1x128xf32> to vector<32x128xf32>
    %129 = arith.addf %126, %128 : vector<32x128xf32>
    %cst_57 = arith.constant 0.000000e+00 : f32
    %130 = vector.broadcast %cst_57 : f32 to vector<32x128xf32>
    %131 = arith.maximumf %129, %130 : vector<32x128xf32>
    %132 = arith.addf %131, %114 : vector<32x128xf32>
    %cst_58 = arith.constant 0.000000e+00 : f32
    %133 = vector.broadcast %cst_58 : f32 to vector<32x128xf32>
    %134 = arith.maximumf %132, %133 : vector<32x128xf32>
    %c8_i32 = arith.constant 8 : i32
    %135 = tpu.dynamic_rotate %134 by %c8_i32 dim 0 : vector<32x128xf32>, i32 -> vector<32x128xf32>
    %c8_i32_59 = arith.constant 8 : i32
    %136 = vector.broadcast %c8_i32_59 : i32 to vector<32x1xi32>
    %137 = arith.cmpi sge, %19, %136 : vector<32x1xi32>
    %cst_60 = arith.constant 0.000000e+00 : f32
    %138 = vector.shape_cast %137 : vector<32x1xi1> to vector<32x1xi1>
    %139 = vector.broadcast %138 : vector<32x1xi1> to vector<32x128xi1>
    %140 = vector.broadcast %cst_60 : f32 to vector<32x128xf32>
    %141 = arith.select %139, %135, %140 : vector<32x128xi1>, vector<32x128xf32>
    %142 = arith.truncf %141 : vector<32x128xf32> to vector<32x128xbf16>
    %143 = arith.truncf %134 : vector<32x128xf32> to vector<32x128xbf16>
    %144 = tpu.concatenate %142, %143 in 1 : vector<32x128xbf16>, vector<32x128xbf16> -> vector<32x256xbf16>
    %c0_61 = arith.constant 0 : index
    %c0_62 = arith.constant 0 : index
    %145 = vector.load %arg14[%c0_61, %c0_62] : memref<256x128xbf16, #tpu.memory_space<vmem>>, vector<256x128xbf16>
    %cst_63 = arith.constant dense<0.000000e+00> : vector<32x128xf32>
    %146 = tpu.matmul %144, %145, %cst_63 {dimension_numbers = #tpu.dot_dimension_numbers<[1], [0], [0], [1], [0, 0, 1, 1], [], []>} : vector<32x256xbf16>, vector<256x128xbf16>, vector<32x128xf32> -> vector<32x128xf32>
    %c0_64 = arith.constant 0 : index
    %c0_65 = arith.constant 0 : index
    %147 = vector.load %arg15[%c0_64, %c0_65] : memref<1x128xf32, #tpu.memory_space<vmem>>, vector<1x128xf32>
    %148 = vector.broadcast %147 : vector<1x128xf32> to vector<32x128xf32>
    %149 = arith.addf %146, %148 : vector<32x128xf32>
    %cst_66 = arith.constant 0.000000e+00 : f32
    %150 = vector.broadcast %cst_66 : f32 to vector<32x128xf32>
    %151 = arith.maximumf %149, %150 : vector<32x128xf32>
    %c8_i32_67 = arith.constant 8 : i32
    %152 = tpu.dynamic_rotate %151 by %c8_i32_67 dim 0 : vector<32x128xf32>, i32 -> vector<32x128xf32>
    %c8_i32_68 = arith.constant 8 : i32
    %153 = vector.broadcast %c8_i32_68 : i32 to vector<32x1xi32>
    %154 = arith.cmpi sge, %19, %153 : vector<32x1xi32>
    %cst_69 = arith.constant 0.000000e+00 : f32
    %155 = vector.shape_cast %154 : vector<32x1xi1> to vector<32x1xi1>
    %156 = vector.broadcast %155 : vector<32x1xi1> to vector<32x128xi1>
    %157 = vector.broadcast %cst_69 : f32 to vector<32x128xf32>
    %158 = arith.select %156, %152, %157 : vector<32x128xi1>, vector<32x128xf32>
    %159 = arith.truncf %158 : vector<32x128xf32> to vector<32x128xbf16>
    %160 = arith.truncf %151 : vector<32x128xf32> to vector<32x128xbf16>
    %161 = tpu.concatenate %159, %160 in 1 : vector<32x128xbf16>, vector<32x128xbf16> -> vector<32x256xbf16>
    %c0_70 = arith.constant 0 : index
    %c0_71 = arith.constant 0 : index
    %162 = vector.load %arg16[%c0_70, %c0_71] : memref<256x128xbf16, #tpu.memory_space<vmem>>, vector<256x128xbf16>
    %cst_72 = arith.constant dense<0.000000e+00> : vector<32x128xf32>
    %163 = tpu.matmul %161, %162, %cst_72 {dimension_numbers = #tpu.dot_dimension_numbers<[1], [0], [0], [1], [0, 0, 1, 1], [], []>} : vector<32x256xbf16>, vector<256x128xbf16>, vector<32x128xf32> -> vector<32x128xf32>
    %c0_73 = arith.constant 0 : index
    %c0_74 = arith.constant 0 : index
    %164 = vector.load %arg17[%c0_73, %c0_74] : memref<1x128xf32, #tpu.memory_space<vmem>>, vector<1x128xf32>
    %165 = vector.broadcast %164 : vector<1x128xf32> to vector<32x128xf32>
    %166 = arith.addf %163, %165 : vector<32x128xf32>
    %cst_75 = arith.constant 0.000000e+00 : f32
    %167 = vector.broadcast %cst_75 : f32 to vector<32x128xf32>
    %168 = arith.maximumf %166, %167 : vector<32x128xf32>
    %169 = arith.addf %168, %134 : vector<32x128xf32>
    %cst_76 = arith.constant 0.000000e+00 : f32
    %170 = vector.broadcast %cst_76 : f32 to vector<32x128xf32>
    %171 = arith.maximumf %169, %170 : vector<32x128xf32>
    %172 = vector.shape_cast %171 : vector<32x128xf32> to vector<2x16x128xf32>
    %173 = arith.truncf %172 : vector<2x16x128xf32> to vector<2x16x128xbf16>
    %c0_77 = arith.constant 0 : index
    %c0_78 = arith.constant 0 : index
    %c0_79 = arith.constant 0 : index
    %174 = vector.load %arg18[%c0_77, %c0_78, %c0_79] : memref<2x16x128xbf16, #tpu.memory_space<vmem>>, vector<2x16x128xbf16>
    tpu.vector_store %arg18[%c0_77, %c0_78, %c0_79], %173 {strides = array<i32>} : memref<2x16x128xbf16, #tpu.memory_space<vmem>>, vector<2x16x128xbf16>,
    return
  }
  func.func @transform_0(%arg0: i32) -> (i32, i32, i32) {
    %c0_i32 = arith.constant 0 : i32
    %c0_i32_0 = arith.constant 0 : i32
    %c0_i32_1 = arith.constant 0 : i32
    return %arg0, %c0_i32, %c0_i32_0 : i32, i32, i32
  }
  func.func @transform_1(%arg0: i32) -> (i32, i32) {
    %c0_i32 = arith.constant 0 : i32
    %c0_i32_0 = arith.constant 0 : i32
    %c0_i32_1 = arith.constant 0 : i32
    return %c0_i32, %c0_i32_0 : i32, i32
  }
  func.func @transform_2(%arg0: i32) -> (i32, i32) {
    %c0_i32 = arith.constant 0 : i32
    %c0_i32_0 = arith.constant 0 : i32
    %c0_i32_1 = arith.constant 0 : i32
    return %c0_i32, %c0_i32_0 : i32, i32
  }
  func.func @transform_3(%arg0: i32) -> (i32, i32) {
    %c0_i32 = arith.constant 0 : i32
    %c0_i32_0 = arith.constant 0 : i32
    %c0_i32_1 = arith.constant 0 : i32
    return %c0_i32, %c0_i32_0 : i32, i32
  }
  func.func @transform_4(%arg0: i32) -> (i32, i32) {
    %c0_i32 = arith.constant 0 : i32
    %c0_i32_0 = arith.constant 0 : i32
    %c0_i32_1 = arith.constant 0 : i32
    return %c0_i32, %c0_i32_0 : i32, i32
  }
  func.func @transform_5(%arg0: i32) -> (i32, i32) {
    %c0_i32 = arith.constant 0 : i32
    %c0_i32_0 = arith.constant 0 : i32
    %c0_i32_1 = arith.constant 0 : i32
    return %c0_i32, %c0_i32_0 : i32, i32
  }
  func.func @transform_6(%arg0: i32) -> (i32, i32) {
    %c0_i32 = arith.constant 0 : i32
    %c0_i32_0 = arith.constant 0 : i32
    %c0_i32_1 = arith.constant 0 : i32
    return %c0_i32, %c0_i32_0 : i32, i32
  }
  func.func @transform_7(%arg0: i32) -> (i32, i32) {
    %c0_i32 = arith.constant 0 : i32
    %c0_i32_0 = arith.constant 0 : i32
    %c0_i32_1 = arith.constant 0 : i32
    return %c0_i32, %c0_i32_0 : i32, i32
  }
  func.func @transform_8(%arg0: i32) -> (i32, i32) {
    %c0_i32 = arith.constant 0 : i32
    %c0_i32_0 = arith.constant 0 : i32
    %c0_i32_1 = arith.constant 0 : i32
    return %c0_i32, %c0_i32_0 : i32, i32
  }
  func.func @transform_9(%arg0: i32) -> (i32, i32) {
    %c0_i32 = arith.constant 0 : i32
    %c0_i32_0 = arith.constant 0 : i32
    %c0_i32_1 = arith.constant 0 : i32
    return %c0_i32, %c0_i32_0 : i32, i32
  }
  func.func @transform_10(%arg0: i32) -> (i32, i32) {
    %c0_i32 = arith.constant 0 : i32
    %c0_i32_0 = arith.constant 0 : i32
    %c0_i32_1 = arith.constant 0 : i32
    return %c0_i32, %c0_i32_0 : i32, i32
  }
  func.func @transform_11(%arg0: i32) -> (i32, i32) {
    %c0_i32 = arith.constant 0 : i32
    %c0_i32_0 = arith.constant 0 : i32
    %c0_i32_1 = arith.constant 0 : i32
    return %c0_i32, %c0_i32_0 : i32, i32
  }
  func.func @transform_12(%arg0: i32) -> (i32, i32) {
    %c0_i32 = arith.constant 0 : i32
    %c0_i32_0 = arith.constant 0 : i32
    %c0_i32_1 = arith.constant 0 : i32
    return %c0_i32, %c0_i32_0 : i32, i32
  }
  func.func @transform_13(%arg0: i32) -> (i32, i32) {
    %c0_i32 = arith.constant 0 : i32
    %c0_i32_0 = arith.constant 0 : i32
    %c0_i32_1 = arith.constant 0 : i32
    return %c0_i32, %c0_i32_0 : i32, i32
  }
  func.func @transform_14(%arg0: i32) -> (i32, i32) {
    %c0_i32 = arith.constant 0 : i32
    %c0_i32_0 = arith.constant 0 : i32
    %c0_i32_1 = arith.constant 0 : i32
    return %c0_i32, %c0_i32_0 : i32, i32
  }
  func.func @transform_15(%arg0: i32) -> (i32, i32) {
    %c0_i32 = arith.constant 0 : i32
    %c0_i32_0 = arith.constant 0 : i32
    %c0_i32_1 = arith.constant 0 : i32
    return %c0_i32, %c0_i32_0 : i32, i32
  }
  func.func @transform_16(%arg0: i32) -> (i32, i32) {
    %c0_i32 = arith.constant 0 : i32
    %c0_i32_0 = arith.constant 0 : i32
    %c0_i32_1 = arith.constant 0 : i32
    return %c0_i32, %c0_i32_0 : i32, i32
  }
  func.func @transform_17(%arg0: i32) -> (i32, i32, i32) {
    %c0_i32 = arith.constant 0 : i32
    %c0_i32_0 = arith.constant 0 : i32
    %c0_i32_1 = arith.constant 0 : i32
    return %arg0, %c0_i32, %c0_i32_0 : i32, i32, i32
  }
}

</mosaic_0001>

<llo_original>
// kernel: tpu_custom_call.1
$region0: #{tpu_custom_call.1}
  #allocation0 [shape = 'u32[]', space=smem, size = 0x4, offset = 0x4, fixed_abs, tag = 'smem constant byte address 0x4 - core index']
  #allocation1 [shape = 'u32[144,128]{1,0:T(1,128)}', space=vmem, size = 0x12000, scoped, tag = 'internal scratch']
  %s0 = inlined_call_operand.hbm [shape: bf16[4,16,128], index: 0, kind: input, shape index: {}]
  %s1 = inlined_call_operand.hbm [shape: bf16[256,256], index: 1, kind: input, shape index: {}]
  %s2 = inlined_call_operand.vmem [shape: f32[1,256], index: 2, kind: input, shape index: {}]
  %s3 = inlined_call_operand.hbm [shape: bf16[256,128], index: 3, kind: input, shape index: {}]
  %s4 = inlined_call_operand.vmem [shape: f32[1,128], index: 4, kind: input, shape index: {}]
  %s5 = inlined_call_operand.hbm [shape: bf16[256,128], index: 5, kind: input, shape index: {}]
  %s6 = inlined_call_operand.vmem [shape: f32[1,128], index: 6, kind: input, shape index: {}]
  %s7 = inlined_call_operand.hbm [shape: bf16[256,128], index: 7, kind: input, shape index: {}]
  %s8 = inlined_call_operand.vmem [shape: f32[1,128], index: 8, kind: input, shape index: {}]
  %s9 = inlined_call_operand.hbm [shape: bf16[256,256], index: 9, kind: input, shape index: {}]
  %s10 = inlined_call_operand.vmem [shape: f32[1,256], index: 10, kind: input, shape index: {}]
  %s11 = inlined_call_operand.hbm [shape: bf16[256,128], index: 11, kind: input, shape index: {}]
  %s12 = inlined_call_operand.vmem [shape: f32[1,128], index: 12, kind: input, shape index: {}]
  %s13 = inlined_call_operand.hbm [shape: bf16[256,128], index: 13, kind: input, shape index: {}]
  %s14 = inlined_call_operand.vmem [shape: f32[1,128], index: 14, kind: input, shape index: {}]
  %s15 = inlined_call_operand.hbm [shape: bf16[256,128], index: 15, kind: input, shape index: {}]
  %s16 = inlined_call_operand.vmem [shape: f32[1,128], index: 16, kind: input, shape index: {}]
  %s17 = inlined_call_operand.hbm [shape: bf16[4,16,128], index: 17, kind: output, shape index: {}]
  %s18 = sld [smem:[#allocation0]]
  $region137: #{tpu_custom_call.1} parent=0
    _
  %s20 = ssub.s32 1, %s18
  %s21 = scalar_select 0, %s20, %s18
  $region1: #{tpu_custom_call.1} parent=0
    #allocation2 [shape = 'u8[16384]{0}', space=vmem, size = 0x4000, scoped, tag = 'input window, operand 0']
    #allocation3 [shape = 's32[2]{0}', space=sflag, size = 0x8, scoped, tag = 'scoped memory for tpu_custom_call.1']
    #allocation4 [shape = 's32[2]{0}', space=sflag, size = 0x8, scoped, tag = 'scoped memory for tpu_custom_call.1']
    #allocation5 [shape = 'u8[131072]{0}', space=vmem, size = 0x20000, scoped, tag = 'input window, operand 1, single buffered']
    #allocation6 [shape = 's32[1]{0}', space=sflag, size = 0x4, scoped, tag = 'scoped memory for tpu_custom_call.1']
    #allocation7 [shape = 'u8[65536]{0}', space=vmem, size = 0x10000, scoped, tag = 'input window, operand 3, single buffered']
    #allocation8 [shape = 'u8[65536]{0}', space=vmem, size = 0x10000, scoped, tag = 'input window, operand 5, single buffered']
    #allocation9 [shape = 's32[1]{0}', space=sflag, size = 0x4, scoped, tag = 'scoped memory for tpu_custom_call.1']
    #allocation10 [shape = 'u8[65536]{0}', space=vmem, size = 0x10000, scoped, tag = 'input window, operand 7, single buffered']
    #allocation11 [shape = 'u8[131072]{0}', space=vmem, size = 0x20000, scoped, tag = 'input window, operand 9, single buffered']
    #allocation12 [shape = 's32[1]{0}', space=sflag, size = 0x4, scoped, tag = 'scoped memory for tpu_custom_call.1']
    #allocation13 [shape = 'u8[65536]{0}', space=vmem, size = 0x10000, scoped, tag = 'input window, operand 11, single buffered']
    #allocation14 [shape = 'u8[65536]{0}', space=vmem, size = 0x10000, scoped, tag = 'input window, operand 13, single buffered']
    #allocation15 [shape = 's32[1]{0}', space=sflag, size = 0x4, scoped, tag = 'scoped memory for tpu_custom_call.1']
    #allocation16 [shape = 'u8[65536]{0}', space=vmem, size = 0x10000, scoped, tag = 'input window, operand 15, single buffered']
    #allocation17 [shape = 'u8[16384]{0}', space=vmem, size = 0x4000, scoped, tag = 'output window, operand 0']
    %22 = vsyncpa [#allocation3], 0
    %s23 = scalar_lea.sflag [#allocation3], 1
    %24 = vsyncpa %s23, 0
    %25 = vsyncpa [#allocation6], 0
    %26 = vsyncpa [#allocation9], 0
    %27 = vsyncpa [#allocation12], 0
    %28 = vsyncpa [#allocation15], 0
    %29 = vsyncpa [#allocation4], 0
    %s30 = scalar_lea.sflag [#allocation4], 1
    %31 = vsyncpa %s30, 0
    loop: start=0, step=1, limit=4
    $region2: #{tpu_custom_call.1} parent=1 // loop_pre_header
      _
    $region3: #{tpu_custom_call.1} parent=1 // loop_header
      %s33 = sphi 0, %s37
      %p34 = scmp.ge.s32.totalorder %s33, 4
      %s43 = sphi 0, %s45
      %s46 = sphi 0, %s43
      %s47 = sphi 0, %s46
      %s63 = sphi 0, %s47
      %s67 = sphi 0, %s67
      %s69 = sphi 0, %s67
      %s70 = sphi 0, %s69
      %s84 = sphi 0, %s70
      %s88 = sphi 0, %s88
      %s90 = sphi 0, %s88
      %s91 = sphi 0, %s90
      %s105 = sphi 0, %s91
      %s109 = sphi 0, %s109
      %s111 = sphi 0, %s109
      %s112 = sphi 0, %s111
      %s126 = sphi 0, %s112
      %s130 = sphi 0, %s130
      %s132 = sphi 0, %s130
      %s133 = sphi 0, %s132
      %s147 = sphi 0, %s133
      %s151 = sphi 0, %s151
      %s153 = sphi 0, %s151
      %s154 = sphi 0, %s153
      %s168 = sphi 0, %s154
      %s172 = sphi 0, %s172
      %s174 = sphi 0, %s172
      %s175 = sphi 0, %s174
      %s189 = sphi 0, %s175
      %s193 = sphi 0, %s193
      %s195 = sphi 0, %s193
      %s196 = sphi 0, %s195
      %s210 = sphi 0, %s196
      %s214 = sphi 0, %s214
      %s216 = sphi 0, %s214
      %s217 = sphi 0, %s216
      %s231 = sphi 0, %s217
      %s235 = sphi 0, %s235
      %s237 = sphi 0, %s235
      %s238 = sphi 0, %s237
      %s252 = sphi 0, %s238
      %s256 = sphi 0, %s256
      %s258 = sphi 0, %s256
      %s259 = sphi 0, %s258
      %s273 = sphi 0, %s259
      %s277 = sphi 0, %s277
      %s279 = sphi 0, %s277
      %s280 = sphi 0, %s279
      %s294 = sphi 0, %s280
      %s298 = sphi 0, %s298
      %s300 = sphi 0, %s298
      %s301 = sphi 0, %s300
      %s315 = sphi 0, %s301
      %s319 = sphi 0, %s319
      %s321 = sphi 0, %s319
      %s322 = sphi 0, %s321
      %s336 = sphi 0, %s322
      %s340 = sphi 0, %s340
      %s342 = sphi 0, %s340
      %s343 = sphi 0, %s342
      %s357 = sphi 0, %s343
      %s361 = sphi 0, %s361
      %s363 = sphi 0, %s361
      %s364 = sphi 0, %s363
      %s378 = sphi 0, %s364
      %s382 = sphi 0, %s382
      %s384 = sphi 0, %s382
      %s385 = sphi 0, %s384
      %s399 = sphi 0, %s385
      %s405 = sphi 0, %s407
      %s408 = sphi 0, %s405
      %s409 = sphi 0, %s408
      %s425 = sphi 0, %s409
    $region4: #{tpu_custom_call.1} parent=1 // loop_header_branch
      %36 = sbr.rel (%p34) target = $region8
    $region5: #{tpu_custom_call.1} parent=1 // loop_body
      %s38 = ssub.s32 %s33, 1
      %s39 = ssub.s32 %s33, 2
      %s40 = sadd.s32 %s33, 1
      %s41 = ssub.s32 %s33, %s40
      %p42 = scmp.eq.s32.totalorder %s41, 0
      %s44 = sadd.s32 %s43, 1
      %s45 = scalar_select %p42, %s43, %s44
      %p48 = pneg %p42
      %p49 = scmp.eq.s32.totalorder %s33, 1
      %p50 = por %p48, %p49
      %p51 = scmp.ne.s32.totalorder %s43, %s46
      %p52 = scmp.eq.s32.totalorder %s33, 0
      %p53 = por %p51, %p52
      %p54 = scmp.ne.s32.totalorder %s43, %s46
      %p55 = scmp.eq.s32.totalorder %s38, 1
      %p56 = por %p54, %p55
      %p57 = scmp.ne.s32.totalorder %s46, %s47
      %p58 = scmp.eq.s32.totalorder %s38, 0
      %p59 = por %p57, %p58
      %p60 = scmp.ne.s32.totalorder %s46, %s47
      %p61 = scmp.eq.s32.totalorder %s39, 1
      %p62 = por %p60, %p61
      %p64 = scmp.ne.s32.totalorder %s47, %s63
      %p65 = scmp.eq.s32.totalorder %s39, 0
      %p66 = por %p64, %p65
      %s68 = sadd.s32 %s67, 1
      %p71 = scmp.eq.s32.totalorder %s33, 1
      %p72 = scmp.ne.s32.totalorder %s67, %s69
      %p73 = scmp.eq.s32.totalorder %s33, 0
      %p74 = por %p72, %p73
      %p75 = scmp.ne.s32.totalorder %s67, %s69
      %p76 = scmp.eq.s32.totalorder %s38, 1
      %p77 = por %p75, %p76
      %p78 = scmp.ne.s32.totalorder %s69, %s70
      %p79 = scmp.eq.s32.totalorder %s38, 0
      %p80 = por %p78, %p79
      %p81 = scmp.ne.s32.totalorder %s69, %s70
      %p82 = scmp.eq.s32.totalorder %s39, 1
      %p83 = por %p81, %p82
      %p85 = scmp.ne.s32.totalorder %s70, %s84
      %p86 = scmp.eq.s32.totalorder %s39, 0
      %p87 = por %p85, %p86
      %s89 = sadd.s32 %s88, 1
      %p92 = scmp.eq.s32.totalorder %s33, 1
      %p93 = scmp.ne.s32.totalorder %s88, %s90
      %p94 = scmp.eq.s32.totalorder %s33, 0
      %p95 = por %p93, %p94
      %p96 = scmp.ne.s32.totalorder %s88, %s90
      %p97 = scmp.eq.s32.totalorder %s38, 1
      %p98 = por %p96, %p97
      %p99 = scmp.ne.s32.totalorder %s90, %s91
      %p100 = scmp.eq.s32.totalorder %s38, 0
      %p101 = por %p99, %p100
      %p102 = scmp.ne.s32.totalorder %s90, %s91
      %p103 = scmp.eq.s32.totalorder %s39, 1
      %p104 = por %p102, %p103
      %p106 = scmp.ne.s32.totalorder %s91, %s105
      %p107 = scmp.eq.s32.totalorder %s39, 0
      %p108 = por %p106, %p107
      %s110 = sadd.s32 %s109, 1
      %p113 = scmp.eq.s32.totalorder %s33, 1
      %p114 = scmp.ne.s32.totalorder %s109, %s111
      %p115 = scmp.eq.s32.totalorder %s33, 0
      %p116 = por %p114, %p115
      %p117 = scmp.ne.s32.totalorder %s109, %s111
      %p118 = scmp.eq.s32.totalorder %s38, 1
      %p119 = por %p117, %p118
      %p120 = scmp.ne.s32.totalorder %s111, %s112
      %p121 = scmp.eq.s32.totalorder %s38, 0
      %p122 = por %p120, %p121
      %p123 = scmp.ne.s32.totalorder %s111, %s112
      %p124 = scmp.eq.s32.totalorder %s39, 1
      %p125 = por %p123, %p124
      %p127 = scmp.ne.s32.totalorder %s112, %s126
      %p128 = scmp.eq.s32.totalorder %s39, 0
      %p129 = por %p127, %p128
      %s131 = sadd.s32 %s130, 1
      %p134 = scmp.eq.s32.totalorder %s33, 1
      %p135 = scmp.ne.s32.totalorder %s130, %s132
      %p136 = scmp.eq.s32.totalorder %s33, 0
      %p137 = por %p135, %p136
      %p138 = scmp.ne.s32.totalorder %s130, %s132
      %p139 = scmp.eq.s32.totalorder %s38, 1
      %p140 = por %p138, %p139
      %p141 = scmp.ne.s32.totalorder %s132, %s133
      %p142 = scmp.eq.s32.totalorder %s38, 0
      %p143 = por %p141, %p142
      %p144 = scmp.ne.s32.totalorder %s132, %s133
      %p145 = scmp.eq.s32.totalorder %s39, 1
      %p146 = por %p144, %p145
      %p148 = scmp.ne.s32.totalorder %s133, %s147
      %p149 = scmp.eq.s32.totalorder %s39, 0
      %p150 = por %p148, %p149
      %s152 = sadd.s32 %s151, 1
      %p155 = scmp.eq.s32.totalorder %s33, 1
      %p156 = scmp.ne.s32.totalorder %s151, %s153
      %p157 = scmp.eq.s32.totalorder %s33, 0
      %p158 = por %p156, %p157
      %p159 = scmp.ne.s32.totalorder %s151, %s153
      %p160 = scmp.eq.s32.totalorder %s38, 1
      %p161 = por %p159, %p160
      %p162 = scmp.ne.s32.totalorder %s153, %s154
      %p163 = scmp.eq.s32.totalorder %s38, 0
      %p164 = por %p162, %p163
      %p165 = scmp.ne.s32.totalorder %s153, %s154
      %p166 = scmp.eq.s32.totalorder %s39, 1
      %p167 = por %p165, %p166
      %p169 = scmp.ne.s32.totalorder %s154, %s168
      %p170 = scmp.eq.s32.totalorder %s39, 0
      %p171 = por %p169, %p170
      %s173 = sadd.s32 %s172, 1
      %p176 = scmp.eq.s32.totalorder %s33, 1
      %p177 = scmp.ne.s32.totalorder %s172, %s174
      %p178 = scmp.eq.s32.totalorder %s33, 0
      %p179 = por %p177, %p178
      %p180 = scmp.ne.s32.totalorder %s172, %s174
      %p181 = scmp.eq.s32.totalorder %s38, 1
      %p182 = por %p180, %p181
      %p183 = scmp.ne.s32.totalorder %s174, %s175
      %p184 = scmp.eq.s32.totalorder %s38, 0
      %p185 = por %p183, %p184
      %p186 = scmp.ne.s32.totalorder %s174, %s175
      %p187 = scmp.eq.s32.totalorder %s39, 1
      %p188 = por %p186, %p187
      %p190 = scmp.ne.s32.totalorder %s175, %s189
      %p191 = scmp.eq.s32.totalorder %s39, 0
      %p192 = por %p190, %p191
      %s194 = sadd.s32 %s193, 1
      %p197 = scmp.eq.s32.totalorder %s33, 1
      %p198 = scmp.ne.s32.totalorder %s193, %s195
      %p199 = scmp.eq.s32.totalorder %s33, 0
      %p200 = por %p198, %p199
      %p201 = scmp.ne.s32.totalorder %s193, %s195
      %p202 = scmp.eq.s32.totalorder %s38, 1
      %p203 = por %p201, %p202
      %p204 = scmp.ne.s32.totalorder %s195, %s196
      %p205 = scmp.eq.s32.totalorder %s38, 0
      %p206 = por %p204, %p205
      %p207 = scmp.ne.s32.totalorder %s195, %s196
      %p208 = scmp.eq.s32.totalorder %s39, 1
      %p209 = por %p207, %p208
      %p211 = scmp.ne.s32.totalorder %s196, %s210
      %p212 = scmp.eq.s32.totalorder %s39, 0
      %p213 = por %p211, %p212
      %s215 = sadd.s32 %s214, 1
      %p218 = scmp.eq.s32.totalorder %s33, 1
      %p219 = scmp.ne.s32.totalorder %s214, %s216
      %p220 = scmp.eq.s32.totalorder %s33, 0
      %p221 = por %p219, %p220
      %p222 = scmp.ne.s32.totalorder %s214, %s216
      %p223 = scmp.eq.s32.totalorder %s38, 1
      %p224 = por %p222, %p223
      %p225 = scmp.ne.s32.totalorder %s216, %s217
      %p226 = scmp.eq.s32.totalorder %s38, 0
      %p227 = por %p225, %p226
      %p228 = scmp.ne.s32.totalorder %s216, %s217
      %p229 = scmp.eq.s32.totalorder %s39, 1
      %p230 = por %p228, %p229
      %p232 = scmp.ne.s32.totalorder %s217, %s231
      %p233 = scmp.eq.s32.totalorder %s39, 0
      %p234 = por %p232, %p233
      %s236 = sadd.s32 %s235, 1
      %p239 = scmp.eq.s32.totalorder %s33, 1
      %p240 = scmp.ne.s32.totalorder %s235, %s237
      %p241 = scmp.eq.s32.totalorder %s33, 0
      %p242 = por %p240, %p241
      %p243 = scmp.ne.s32.totalorder %s235, %s237
      %p244 = scmp.eq.s32.totalorder %s38, 1
      %p245 = por %p243, %p244
      %p246 = scmp.ne.s32.totalorder %s237, %s238
      %p247 = scmp.eq.s32.totalorder %s38, 0
      %p248 = por %p246, %p247
      %p249 = scmp.ne.s32.totalorder %s237, %s238
      %p250 = scmp.eq.s32.totalorder %s39, 1
      %p251 = por %p249, %p250
      %p253 = scmp.ne.s32.totalorder %s238, %s252
      %p254 = scmp.eq.s32.totalorder %s39, 0
      %p255 = por %p253, %p254
      %s257 = sadd.s32 %s256, 1
      %p260 = scmp.eq.s32.totalorder %s33, 1
      %p261 = scmp.ne.s32.totalorder %s256, %s258
      %p262 = scmp.eq.s32.totalorder %s33, 0
      %p263 = por %p261, %p262
      %p264 = scmp.ne.s32.totalorder %s256, %s258
      %p265 = scmp.eq.s32.totalorder %s38, 1
      %p266 = por %p264, %p265
      %p267 = scmp.ne.s32.totalorder %s258, %s259
      %p268 = scmp.eq.s32.totalorder %s38, 0
      %p269 = por %p267, %p268
      %p270 = scmp.ne.s32.totalorder %s258, %s259
      %p271 = scmp.eq.s32.totalorder %s39, 1
      %p272 = por %p270, %p271
      %p274 = scmp.ne.s32.totalorder %s259, %s273
      %p275 = scmp.eq.s32.totalorder %s39, 0
      %p276 = por %p274, %p275
      %s278 = sadd.s32 %s277, 1
      %p281 = scmp.eq.s32.totalorder %s33, 1
      %p282 = scmp.ne.s32.totalorder %s277, %s279
      %p283 = scmp.eq.s32.totalorder %s33, 0
      %p284 = por %p282, %p283
      %p285 = scmp.ne.s32.totalorder %s277, %s279
      %p286 = scmp.eq.s32.totalorder %s38, 1
      %p287 = por %p285, %p286
      %p288 = scmp.ne.s32.totalorder %s279, %s280
      %p289 = scmp.eq.s32.totalorder %s38, 0
      %p290 = por %p288, %p289
      %p291 = scmp.ne.s32.totalorder %s279, %s280
      %p292 = scmp.eq.s32.totalorder %s39, 1
      %p293 = por %p291, %p292
      %p295 = scmp.ne.s32.totalorder %s280, %s294
      %p296 = scmp.eq.s32.totalorder %s39, 0
      %p297 = por %p295, %p296
      %s299 = sadd.s32 %s298, 1
      %p302 = scmp.eq.s32.totalorder %s33, 1
      %p303 = scmp.ne.s32.totalorder %s298, %s300
      %p304 = scmp.eq.s32.totalorder %s33, 0
      %p305 = por %p303, %p304
      %p306 = scmp.ne.s32.totalorder %s298, %s300
      %p307 = scmp.eq.s32.totalorder %s38, 1
      %p308 = por %p306, %p307
      %p309 = scmp.ne.s32.totalorder %s300, %s301
      %p310 = scmp.eq.s32.totalorder %s38, 0
      %p311 = por %p309, %p310
      %p312 = scmp.ne.s32.totalorder %s300, %s301
      %p313 = scmp.eq.s32.totalorder %s39, 1
      %p314 = por %p312, %p313
      %p316 = scmp.ne.s32.totalorder %s301, %s315
      %p317 = scmp.eq.s32.totalorder %s39, 0
      %p318 = por %p316, %p317
      %s320 = sadd.s32 %s319, 1
      %p323 = scmp.eq.s32.totalorder %s33, 1
      %p324 = scmp.ne.s32.totalorder %s319, %s321
      %p325 = scmp.eq.s32.totalorder %s33, 0
      %p326 = por %p324, %p325
      %p327 = scmp.ne.s32.totalorder %s319, %s321
      %p328 = scmp.eq.s32.totalorder %s38, 1
      %p329 = por %p327, %p328
      %p330 = scmp.ne.s32.totalorder %s321, %s322
      %p331 = scmp.eq.s32.totalorder %s38, 0
      %p332 = por %p330, %p331
      %p333 = scmp.ne.s32.totalorder %s321, %s322
      %p334 = scmp.eq.s32.totalorder %s39, 1
      %p335 = por %p333, %p334
      %p337 = scmp.ne.s32.totalorder %s322, %s336
      %p338 = scmp.eq.s32.totalorder %s39, 0
      %p339 = por %p337, %p338
      %s341 = sadd.s32 %s340, 1
      %p344 = scmp.eq.s32.totalorder %s33, 1
      %p345 = scmp.ne.s32.totalorder %s340, %s342
      %p346 = scmp.eq.s32.totalorder %s33, 0
      %p347 = por %p345, %p346
      %p348 = scmp.ne.s32.totalorder %s340, %s342
      %p349 = scmp.eq.s32.totalorder %s38, 1
      %p350 = por %p348, %p349
      %p351 = scmp.ne.s32.totalorder %s342, %s343
      %p352 = scmp.eq.s32.totalorder %s38, 0
      %p353 = por %p351, %p352
      %p354 = scmp.ne.s32.totalorder %s342, %s343
      %p355 = scmp.eq.s32.totalorder %s39, 1
      %p356 = por %p354, %p355
      %p358 = scmp.ne.s32.totalorder %s343, %s357
      %p359 = scmp.eq.s32.totalorder %s39, 0
      %p360 = por %p358, %p359
      %s362 = sadd.s32 %s361, 1
      %p365 = scmp.eq.s32.totalorder %s33, 1
      %p366 = scmp.ne.s32.totalorder %s361, %s363
      %p367 = scmp.eq.s32.totalorder %s33, 0
      %p368 = por %p366, %p367
      %p369 = scmp.ne.s32.totalorder %s361, %s363
      %p370 = scmp.eq.s32.totalorder %s38, 1
      %p371 = por %p369, %p370
      %p372 = scmp.ne.s32.totalorder %s363, %s364
      %p373 = scmp.eq.s32.totalorder %s38, 0
      %p374 = por %p372, %p373
      %p375 = scmp.ne.s32.totalorder %s363, %s364
      %p376 = scmp.eq.s32.totalorder %s39, 1
      %p377 = por %p375, %p376
      %p379 = scmp.ne.s32.totalorder %s364, %s378
      %p380 = scmp.eq.s32.totalorder %s39, 0
      %p381 = por %p379, %p380
      %s383 = sadd.s32 %s382, 1
      %p386 = scmp.eq.s32.totalorder %s33, 1
      %p387 = scmp.ne.s32.totalorder %s382, %s384
      %p388 = scmp.eq.s32.totalorder %s33, 0
      %p389 = por %p387, %p388
      %p390 = scmp.ne.s32.totalorder %s382, %s384
      %p391 = scmp.eq.s32.totalorder %s38, 1
      %p392 = por %p390, %p391
      %p393 = scmp.ne.s32.totalorder %s384, %s385
      %p394 = scmp.eq.s32.totalorder %s38, 0
      %p395 = por %p393, %p394
      %p396 = scmp.ne.s32.totalorder %s384, %s385
      %p397 = scmp.eq.s32.totalorder %s39, 1
      %p398 = por %p396, %p397
      %p400 = scmp.ne.s32.totalorder %s385, %s399
      %p401 = scmp.eq.s32.totalorder %s39, 0
      %p402 = por %p400, %p401
      %s403 = ssub.s32 %s33, %s40
      %p404 = scmp.eq.s32.totalorder %s403, 0
      %s406 = sadd.s32 %s405, 1
      %s407 = scalar_select %p404, %s405, %s406
      %p410 = pneg %p404
      %p411 = scmp.eq.s32.totalorder %s33, 1
      %p412 = por %p410, %p411
      %p413 = scmp.ne.s32.totalorder %s405, %s408
      %p414 = scmp.eq.s32.totalorder %s33, 0
      %p415 = por %p413, %p414
      %p416 = scmp.ne.s32.totalorder %s405, %s408
      %p417 = scmp.eq.s32.totalorder %s38, 1
      %p418 = por %p416, %p417
      %p419 = scmp.ne.s32.totalorder %s408, %s409
      %p420 = scmp.eq.s32.totalorder %s38, 0
      %p421 = por %p419, %p420
      %p422 = scmp.ne.s32.totalorder %s408, %s409
      %p423 = scmp.eq.s32.totalorder %s39, 1
      %p424 = por %p422, %p423
      %p426 = scmp.ne.s32.totalorder %s409, %s425
      %p427 = scmp.eq.s32.totalorder %s39, 0
      %p428 = por %p426, %p427
      %p429 = scmp.le.s32.totalorder 1, %s33
      %p430 = scmp.lt.s32.totalorder %s33, 3
      %p431 = pnand %p429, %p430
      %p432 = pneg %p431
      // Predicated region
      $region9: #{tpu_custom_call.1} parent=5 // pred_check
        _
      $region10: #{tpu_custom_call.1} parent=5 // pred_check_branch
        %434 = sbr.rel (%p431) target = $region12
      $region11: #{tpu_custom_call.1} parent=5 // pred_region
        %s435 = ssub.s32 %s33, 1
        // Predicated region
        $region13: #{tpu_custom_call.1} parent=11 // pred_check
          %p436 = pneg %p80
        $region14: #{tpu_custom_call.1} parent=11 // pred_check_branch
          %438 = sbr.rel (%p436) target = $region16
        $region15: #{tpu_custom_call.1} parent=11 // pred_region
          %s440 = ssub.s32 4096, 4096
          %441 = vsyncadd [#allocation6], %s440
          %s442 = sshll.u32 [#allocation5], 4
          %s443 = int_to_ptr.vmem [resolvable:$true] %s442
          %448 = dma.hbm_to_vmem [thread:$0]  %s1, 4096, %s443, [#allocation6], 128, 128, 8
        $region16: #{tpu_custom_call.1} parent=11 // pred_fallthru
          _
        // Predicated region
        $region17: #{tpu_custom_call.1} parent=11 // pred_check
          %p449 = pneg %p101
        $region18: #{tpu_custom_call.1} parent=11 // pred_check_branch
          %451 = sbr.rel (%p449) target = $region20
        $region19: #{tpu_custom_call.1} parent=11 // pred_region
          _
        $region20: #{tpu_custom_call.1} parent=11 // pred_fallthru
          _
        // Predicated region
        $region21: #{tpu_custom_call.1} parent=11 // pred_check
          %p452 = pneg %p122
        $region22: #{tpu_custom_call.1} parent=11 // pred_check_branch
          %454 = sbr.rel (%p452) target = $region24
        $region23: #{tpu_custom_call.1} parent=11 // pred_region
          %s456 = ssub.s32 2048, 2048
          %457 = vsyncadd [#allocation6], %s456
          %s458 = sshll.u32 [#allocation7], 4
          %s459 = int_to_ptr.vmem [resolvable:$true] %s458
          %464 = dma.hbm_to_vmem [thread:$0]  %s3, 2048, %s459, [#allocation6], 64, 64, 4
        $region24: #{tpu_custom_call.1} parent=11 // pred_fallthru
          _
        // Predicated region
        $region25: #{tpu_custom_call.1} parent=11 // pred_check
          %p465 = pneg %p143
        $region26: #{tpu_custom_call.1} parent=11 // pred_check_branch
          %467 = sbr.rel (%p465) target = $region28
        $region27: #{tpu_custom_call.1} parent=11 // pred_region
          _
        $region28: #{tpu_custom_call.1} parent=11 // pred_fallthru
          _
        // Predicated region
        $region29: #{tpu_custom_call.1} parent=11 // pred_check
          %p468 = pneg %p164
        $region30: #{tpu_custom_call.1} parent=11 // pred_check_branch
          %470 = sbr.rel (%p468) target = $region32
        $region31: #{tpu_custom_call.1} parent=11 // pred_region
          %s472 = ssub.s32 2048, 2048
          %473 = vsyncadd [#allocation9], %s472
          %s474 = sshll.u32 [#allocation8], 4
          %s475 = int_to_ptr.vmem [resolvable:$true] %s474
          %480 = dma.hbm_to_vmem [thread:$0]  %s5, 2048, %s475, [#allocation9], 64, 64, 4
        $region32: #{tpu_custom_call.1} parent=11 // pred_fallthru
          _
        // Predicated region
        $region33: #{tpu_custom_call.1} parent=11 // pred_check
          %p481 = pneg %p185
        $region34: #{tpu_custom_call.1} parent=11 // pred_check_branch
          %483 = sbr.rel (%p481) target = $region36
        $region35: #{tpu_custom_call.1} parent=11 // pred_region
          _
        $region36: #{tpu_custom_call.1} parent=11 // pred_fallthru
          _
        // Predicated region
        $region37: #{tpu_custom_call.1} parent=11 // pred_check
          %p484 = pneg %p206
        $region38: #{tpu_custom_call.1} parent=11 // pred_check_branch
          %486 = sbr.rel (%p484) target = $region40
        $region39: #{tpu_custom_call.1} parent=11 // pred_region
          %s488 = ssub.s32 2048, 2048
          %489 = vsyncadd [#allocation9], %s488
          %s490 = sshll.u32 [#allocation10], 4
          %s491 = int_to_ptr.vmem [resolvable:$true] %s490
          %496 = dma.hbm_to_vmem [thread:$0]  %s7, 2048, %s491, [#allocation9], 64, 64, 4
        $region40: #{tpu_custom_call.1} parent=11 // pred_fallthru
          _
        // Predicated region
        $region41: #{tpu_custom_call.1} parent=11 // pred_check
          %p497 = pneg %p227
        $region42: #{tpu_custom_call.1} parent=11 // pred_check_branch
          %499 = sbr.rel (%p497) target = $region44
        $region43: #{tpu_custom_call.1} parent=11 // pred_region
          _
        $region44: #{tpu_custom_call.1} parent=11 // pred_fallthru
          _
        // Predicated region
        $region45: #{tpu_custom_call.1} parent=11 // pred_check
          %p500 = pneg %p248
        $region46: #{tpu_custom_call.1} parent=11 // pred_check_branch
          %502 = sbr.rel (%p500) target = $region48
        $region47: #{tpu_custom_call.1} parent=11 // pred_region
          %s504 = ssub.s32 4096, 4096
          %505 = vsyncadd [#allocation12], %s504
          %s506 = sshll.u32 [#allocation11], 4
          %s507 = int_to_ptr.vmem [resolvable:$true] %s506
          %512 = dma.hbm_to_vmem [thread:$0]  %s9, 4096, %s507, [#allocation12], 128, 128, 8
        $region48: #{tpu_custom_call.1} parent=11 // pred_fallthru
          _
        // Predicated region
        $region49: #{tpu_custom_call.1} parent=11 // pred_check
          %p513 = pneg %p269
        $region50: #{tpu_custom_call.1} parent=11 // pred_check_branch
          %515 = sbr.rel (%p513) target = $region52
        $region51: #{tpu_custom_call.1} parent=11 // pred_region
          _
        $region52: #{tpu_custom_call.1} parent=11 // pred_fallthru
          _
        // Predicated region
        $region53: #{tpu_custom_call.1} parent=11 // pred_check
          %p516 = pneg %p290
        $region54: #{tpu_custom_call.1} parent=11 // pred_check_branch
          %518 = sbr.rel (%p516) target = $region56
        $region55: #{tpu_custom_call.1} parent=11 // pred_region
          %s520 = ssub.s32 2048, 2048
          %521 = vsyncadd [#allocation12], %s520
          %s522 = sshll.u32 [#allocation13], 4
          %s523 = int_to_ptr.vmem [resolvable:$true] %s522
          %528 = dma.hbm_to_vmem [thread:$0]  %s11, 2048, %s523, [#allocation12], 64, 64, 4
        $region56: #{tpu_custom_call.1} parent=11 // pred_fallthru
          _
        // Predicated region
        $region57: #{tpu_custom_call.1} parent=11 // pred_check
          %p529 = pneg %p311
        $region58: #{tpu_custom_call.1} parent=11 // pred_check_branch
          %531 = sbr.rel (%p529) target = $region60
        $region59: #{tpu_custom_call.1} parent=11 // pred_region
          _
        $region60: #{tpu_custom_call.1} parent=11 // pred_fallthru
          _
        // Predicated region
        $region61: #{tpu_custom_call.1} parent=11 // pred_check
          %p532 = pneg %p332
        $region62: #{tpu_custom_call.1} parent=11 // pred_check_branch
          %534 = sbr.rel (%p532) target = $region64
        $region63: #{tpu_custom_call.1} parent=11 // pred_region
          %s536 = ssub.s32 2048, 2048
          %537 = vsyncadd [#allocation15], %s536
          %s538 = sshll.u32 [#allocation14], 4
          %s539 = int_to_ptr.vmem [resolvable:$true] %s538
          %544 = dma.hbm_to_vmem [thread:$0]  %s13, 2048, %s539, [#allocation15], 64, 64, 4
        $region64: #{tpu_custom_call.1} parent=11 // pred_fallthru
          _
        // Predicated region
        $region65: #{tpu_custom_call.1} parent=11 // pred_check
          %p545 = pneg %p353
        $region66: #{tpu_custom_call.1} parent=11 // pred_check_branch
          %547 = sbr.rel (%p545) target = $region68
        $region67: #{tpu_custom_call.1} parent=11 // pred_region
          _
        $region68: #{tpu_custom_call.1} parent=11 // pred_fallthru
          _
        // Predicated region
        $region69: #{tpu_custom_call.1} parent=11 // pred_check
          %p548 = pneg %p374
        $region70: #{tpu_custom_call.1} parent=11 // pred_check_branch
          %550 = sbr.rel (%p548) target = $region72
        $region71: #{tpu_custom_call.1} parent=11 // pred_region
          %s552 = ssub.s32 2048, 2048
          %553 = vsyncadd [#allocation15], %s552
          %s554 = sshll.u32 [#allocation16], 4
          %s555 = int_to_ptr.vmem [resolvable:$true] %s554
          %560 = dma.hbm_to_vmem [thread:$0]  %s15, 2048, %s555, [#allocation15], 64, 64, 4
        $region72: #{tpu_custom_call.1} parent=11 // pred_fallthru
          _
        // Predicated region
        $region73: #{tpu_custom_call.1} parent=11 // pred_check
          %p561 = pneg %p395
        $region74: #{tpu_custom_call.1} parent=11 // pred_check_branch
          %563 = sbr.rel (%p561) target = $region76
        $region75: #{tpu_custom_call.1} parent=11 // pred_region
          _
        $region76: #{tpu_custom_call.1} parent=11 // pred_fallthru
          _
      $region12: #{tpu_custom_call.1} parent=5 // pred_fallthru
        _
      %p564 = scmp.lt.s32.totalorder %s33, 2
      // Predicated region
      $region77: #{tpu_custom_call.1} parent=5 // pred_check
        %p565 = pneg %p564
      $region78: #{tpu_custom_call.1} parent=5 // pred_check_branch
        %567 = sbr.rel (%p565) target = $region80
      $region79: #{tpu_custom_call.1} parent=5 // pred_region
        // Predicated region
        $region81: #{tpu_custom_call.1} parent=79 // pred_check
          %p568 = pneg %p53
        $region82: #{tpu_custom_call.1} parent=79 // pred_check_branch
          %570 = sbr.rel (%p568) target = $region84
        $region83: #{tpu_custom_call.1} parent=79 // pred_region
          %s571 = sand.u32 %s43, 1
          %s572 = scalar_lea.sflag [#allocation3], %s571
          %s573 = sand.u32 %s43, 1
          %s574 = smul.addr %s573, 16
          %s575 = scalar_lea.vmem [#allocation2], %s574
          %s576 = smul.u32 2, %s33
          %s578 = ssub.s32 256, 256
          %579 = vsyncadd %s572, %s578
          %s580 = smul.addr %s576, 2
          %s581 = smul.addr %s580, 64
          %s582 = scalar_lea.hbm %s0, %s581
          %s583 = sshll.u32 %s575, 4
          %s584 = int_to_ptr.vmem [resolvable:$true] %s583
          %589 = dma.hbm_to_vmem [thread:$0]  %s582, 256, %s584, %s572, 64, 64, 4
        $region84: #{tpu_custom_call.1} parent=79 // pred_fallthru
          _
      $region80: #{tpu_custom_call.1} parent=5 // pred_fallthru
        _
      %p590 = scmp.le.s32.totalorder 1, %s33
      %p591 = scmp.lt.s32.totalorder %s33, 3
      %p592 = pnand %p590, %p591
      %p593 = pneg %p592
      // Predicated region
      $region85: #{tpu_custom_call.1} parent=5 // pred_check
        _
      $region86: #{tpu_custom_call.1} parent=5 // pred_check_branch
        %595 = sbr.rel (%p592) target = $region88
      $region87: #{tpu_custom_call.1} parent=5 // pred_region
        %s596 = ssub.s32 %s33, 1
        %s597 = sand.u32 %s46, 1
        %s598 = scalar_lea.sflag [#allocation3], %s597
        %s599 = sand.u32 %s46, 1
        %s600 = smul.addr %s599, 16
        %s601 = scalar_lea.vmem [#allocation2], %s600
        // Predicated region
        $region89: #{tpu_custom_call.1} parent=87 // pred_check
          %p602 = pneg %p59
        $region90: #{tpu_custom_call.1} parent=87 // pred_check_branch
          %604 = sbr.rel (%p602) target = $region92
        $region91: #{tpu_custom_call.1} parent=87 // pred_region
          %605 = dma.done %s598, 256
        $region92: #{tpu_custom_call.1} parent=87 // pred_fallthru
          _
        // Predicated region
        $region93: #{tpu_custom_call.1} parent=87 // pred_check
          %p606 = pneg %p80
        $region94: #{tpu_custom_call.1} parent=87 // pred_check_branch
          %608 = sbr.rel (%p606) target = $region96
        $region95: #{tpu_custom_call.1} parent=87 // pred_region
          %609 = dma.done [#allocation6], 4096
        $region96: #{tpu_custom_call.1} parent=87 // pred_fallthru
          _
        // Predicated region
        $region97: #{tpu_custom_call.1} parent=87 // pred_check
          %p610 = pneg %p122
        $region98: #{tpu_custom_call.1} parent=87 // pred_check_branch
          %612 = sbr.rel (%p610) target = $region100
        $region99: #{tpu_custom_call.1} parent=87 // pred_region
          %613 = dma.done [#allocation6], 2048
        $region100: #{tpu_custom_call.1} parent=87 // pred_fallthru
          _
        // Predicated region
        $region101: #{tpu_custom_call.1} parent=87 // pred_check
          %p614 = pneg %p164
        $region102: #{tpu_custom_call.1} parent=87 // pred_check_branch
          %616 = sbr.rel (%p614) target = $region104
        $region103: #{tpu_custom_call.1} parent=87 // pred_region
          %617 = dma.done [#allocation9], 2048
        $region104: #{tpu_custom_call.1} parent=87 // pred_fallthru
          _
        // Predicated region
        $region105: #{tpu_custom_call.1} parent=87 // pred_check
          %p618 = pneg %p206
        $region106: #{tpu_custom_call.1} parent=87 // pred_check_branch
          %620 = sbr.rel (%p618) target = $region108
        $region107: #{tpu_custom_call.1} parent=87 // pred_region
          %621 = dma.done [#allocation9], 2048
        $region108: #{tpu_custom_call.1} parent=87 // pred_fallthru
          _
        // Predicated region
        $region109: #{tpu_custom_call.1} parent=87 // pred_check
          %p622 = pneg %p248
        $region110: #{tpu_custom_call.1} parent=87 // pred_check_branch
          %624 = sbr.rel (%p622) target = $region112
        $region111: #{tpu_custom_call.1} parent=87 // pred_region
          %625 = dma.done [#allocation12], 4096
        $region112: #{tpu_custom_call.1} parent=87 // pred_fallthru
          _
        // Predicated region
        $region113: #{tpu_custom_call.1} parent=87 // pred_check
          %p626 = pneg %p290
        $region114: #{tpu_custom_call.1} parent=87 // pred_check_branch
          %628 = sbr.rel (%p626) target = $region116
        $region115: #{tpu_custom_call.1} parent=87 // pred_region
          %629 = dma.done [#allocation12], 2048
        $region116: #{tpu_custom_call.1} parent=87 // pred_fallthru
          _
        // Predicated region
        $region117: #{tpu_custom_call.1} parent=87 // pred_check
          %p630 = pneg %p332
        $region118: #{tpu_custom_call.1} parent=87 // pred_check_branch
          %632 = sbr.rel (%p630) target = $region120
        $region119: #{tpu_custom_call.1} parent=87 // pred_region
          %633 = dma.done [#allocation15], 2048
        $region120: #{tpu_custom_call.1} parent=87 // pred_fallthru
          _
        // Predicated region
        $region121: #{tpu_custom_call.1} parent=87 // pred_check
          %p634 = pneg %p374
        $region122: #{tpu_custom_call.1} parent=87 // pred_check_branch
          %636 = sbr.rel (%p634) target = $region124
        $region123: #{tpu_custom_call.1} parent=87 // pred_region
          %637 = dma.done [#allocation15], 2048
        $region124: #{tpu_custom_call.1} parent=87 // pred_fallthru
          _
        %s638 = sand.u32 %s46, 1
        %s639 = scalar_lea.sflag [#allocation3], %s638
        %s640 = sand.u32 %s46, 1
        %s641 = smul.addr %s640, 16
        %s642 = scalar_lea.vmem [#allocation2], %s641
        %p643 = pneg %p59
        %p644 = pneg %p56
        %p645 = pneg %p80
        %p646 = pneg %p77
        %p647 = pneg %p101
        %p648 = pneg %p98
        %p649 = pneg %p122
        %p650 = pneg %p119
        %p651 = pneg %p143
        %p652 = pneg %p140
        %p653 = pneg %p164
        %p654 = pneg %p161
        %p655 = pneg %p185
        %p656 = pneg %p182
        %p657 = pneg %p206
        %p658 = pneg %p203
        %p659 = pneg %p227
        %p660 = pneg %p224
        %p661 = pneg %p248
        %p662 = pneg %p245
        %p663 = pneg %p269
        %p664 = pneg %p266
        %p665 = pneg %p290
        %p666 = pneg %p287
        %p667 = pneg %p311
        %p668 = pneg %p308
        %p669 = pneg %p332
        %p670 = pneg %p329
        %p671 = pneg %p353
        %p672 = pneg %p350
        %p673 = pneg %p374
        %p674 = pneg %p371
        %p675 = pneg %p395
        %p676 = pneg %p392
        %p677 = pneg %p421
        %p678 = pneg %p418
        %s679 = sand.u32 %s408, 1
        %s680 = scalar_lea.sflag [#allocation4], %s679
        %s681 = sand.u32 %s408, 1
        %s682 = smul.addr %s681, 16
        %s683 = scalar_lea.vmem [#allocation17], %s682
        %s684 = smul.u32 2, %s38
        %s685 = smul.u32 2, %s38
        %v687 = vld [vmem:[%s601] sm:$0xf]
        %v688 = vld [vmem:[%s601 + $0x4] sm:$0xf]
        %v689 = vld [vmem:[%s601 + $0x8] sm:$0xf]
        %v690 = vld [vmem:[%s601 + $0xc] sm:$0xf]
        %v691 = vunpack.c.l.bf16 %v687
        %v692 = vunpack.c.l.bf16 %v688
        %v693 = vunpack.c.l.bf16 %v689
        %v694 = vunpack.c.l.bf16 %v690
        %v695 = vlaneseq
        %v696 = vshrl.u32 %v695, 7
        %v697 = vadd.s32 %v696, 8
        %v698 = vadd.s32 %v696, 16
        %v699 = vadd.s32 %v696, 24
        %vm700 = vcmp.lt.s32.totalorder %v696, 0
        %v701 = vsub.s32 0, %v696
        %v702 = vsel %vm700, %v701, %v696
        %v703 = vshrl.u32 %v702, 4
        %v704 = vand.u32 %v702, 15
        %v705 = vsub.s32 0, %v704
        %v706 = vsel %vm700, %v705, %v704
        %vm707 = vcmp.lt.s32.totalorder %v697, 0
        %v708 = vsub.s32 0, %v697
        %v709 = vsel %vm707, %v708, %v697
        %v710 = vshrl.u32 %v709, 4
        %v711 = vand.u32 %v709, 15
        %v712 = vsub.s32 0, %v711
        %v713 = vsel %vm707, %v712, %v711
        %vm714 = vcmp.lt.s32.totalorder %v698, 0
        %v715 = vsub.s32 0, %v698
        %v716 = vsel %vm714, %v715, %v698
        %v717 = vshrl.u32 %v716, 4
        %v718 = vand.u32 %v716, 15
        %v719 = vsub.s32 0, %v718
        %v720 = vsel %vm714, %v719, %v718
        %vm721 = vcmp.lt.s32.totalorder %v699, 0
        %v722 = vsub.s32 0, %v699
        %v723 = vsel %vm721, %v722, %v699
        %v724 = vshrl.u32 %v723, 4
        %v725 = vand.u32 %v723, 15
        %v726 = vsub.s32 0, %v725
        %v727 = vsel %vm721, %v726, %v725
        %vm728 = vcmp.ne.s32.totalorder %v706, 0
        %vm729 = vcmp.ne.s32.totalorder %v713, 0
        %vm730 = vcmp.ne.s32.totalorder %v720, 0
        %vm731 = vcmp.ne.s32.totalorder %v727, 0
        %vm732 = vcmp.lt.s32.totalorder %v706, 0
        %vm733 = vcmp.lt.s32.totalorder %v713, 0
        %vm734 = vcmp.lt.s32.totalorder %v720, 0
        %vm735 = vcmp.lt.s32.totalorder %v727, 0
        %vm736 = vmand %vm732, %vm728
        %vm737 = vmand %vm733, %vm729
        %vm738 = vmand %vm734, %vm730
        %vm739 = vmand %vm735, %vm731
        %v740 = vadd.s32 %v706, 16
        %v741 = vadd.s32 %v713, 16
        %v742 = vadd.s32 %v720, 16
        %v743 = vadd.s32 %v727, 16
        %v744 = vsel %vm736, %v740, %v706
        %v745 = vsel %vm737, %v741, %v713
        %v746 = vsel %vm738, %v742, %v720
        %v747 = vsel %vm739, %v743, %v727
        %v748 = vrot.slane %v691, 7
        %v749 = vrot.slane %v692, 7
        %v750 = vrot.slane %v693, 7
        %v751 = vrot.slane %v694, 7
        %vm752 = vcmp.lt.s32.totalorder %v696, 1
        %v753 = vsel %vm752, %v750, %v751
        %v754 = vsel %vm752, %v749, %v750
        %v755 = vsel %vm752, %v748, %v749
        %v756 = vsel %vm752, %v751, %v748
        %vm757 = vcmp.ge.s32.totalorder %v744, 1
        %vm758 = vcmp.ge.s32.totalorder %v745, 1
        %vm759 = vcmp.ge.s32.totalorder %v746, 1
        %vm760 = vcmp.ge.s32.totalorder %v747, 1
        %v761 = vsel %vm757, 1, 0
        %v762 = vsel %vm758, 1, 0
        %v763 = vsel %vm759, 1, 0
        %v764 = vsel %vm760, 1, 0
        %vm765 = vcmp.eq.s32.totalorder %v761, 1
        %vm766 = vcmp.eq.s32.totalorder %v762, 1
        %vm767 = vcmp.eq.s32.totalorder %v763, 1
        %vm768 = vcmp.eq.s32.totalorder %v764, 1
        %v769 = vsel %vm765, %v756, 0.0
        %v770 = vsel %vm766, %v755, 0.0
        %v771 = vsel %vm767, %v754, 0.0
        %v772 = vsel %vm768, %v753, 0.0
        %v773 = vpack.c.bf16 %v770, %v769
        %v774 = vpack.c.bf16 %v772, %v771
        %v779 = vunpack.c.l.b16 %v687
        %v780 = vunpack.c.l.b16 %v688
        %v781 = vunpack.c.l.b16 %v689
        %v782 = vunpack.c.l.b16 %v690
        %v783 = vpack.c.b16 %v780, %v779
        %v784 = vpack.c.b16 %v782, %v781
        %v787 = vld [vmem:[#allocation5] sm:$0xff]
        %v788 = vld [vmem:[#allocation5 + $0x8] sm:$0xff]
        %v789 = vld [vmem:[#allocation5 + $0x10] sm:$0xff]
        %v790 = vld [vmem:[#allocation5 + $0x18] sm:$0xff]
        %v791 = vld [vmem:[#allocation5 + $0x20] sm:$0xff]
        %v792 = vld [vmem:[#allocation5 + $0x28] sm:$0xff]
        %v793 = vld [vmem:[#allocation5 + $0x30] sm:$0xff]
        %v794 = vld [vmem:[#allocation5 + $0x38] sm:$0xff]
        %v795 = vld [vmem:[#allocation5 + $0x40] sm:$0xff]
        %v796 = vld [vmem:[#allocation5 + $0x48] sm:$0xff]
        %v797 = vld [vmem:[#allocation5 + $0x50] sm:$0xff]
        %v798 = vld [vmem:[#allocation5 + $0x58] sm:$0xff]
        %v799 = vld [vmem:[#allocation5 + $0x60] sm:$0xff]
        %v800 = vld [vmem:[#allocation5 + $0x68] sm:$0xff]
        %v801 = vld [vmem:[#allocation5 + $0x70] sm:$0xff]
        %v802 = vld [vmem:[#allocation5 + $0x78] sm:$0xff]
        %v803 = vld [vmem:[#allocation5 + $0x80] sm:$0xff]
        %v804 = vld [vmem:[#allocation5 + $0x88] sm:$0xff]
        %v805 = vld [vmem:[#allocation5 + $0x90] sm:$0xff]
        %v806 = vld [vmem:[#allocation5 + $0x98] sm:$0xff]
        %v807 = vld [vmem:[#allocation5 + $0xa0] sm:$0xff]
        %v808 = vld [vmem:[#allocation5 + $0xa8] sm:$0xff]
        %v809 = vld [vmem:[#allocation5 + $0xb0] sm:$0xff]
        %v810 = vld [vmem:[#allocation5 + $0xb8] sm:$0xff]
        %v811 = vld [vmem:[#allocation5 + $0xc0] sm:$0xff]
        %v812 = vld [vmem:[#allocation5 + $0xc8] sm:$0xff]
        %v813 = vld [vmem:[#allocation5 + $0xd0] sm:$0xff]
        %v814 = vld [vmem:[#allocation5 + $0xd8] sm:$0xff]
        %v815 = vld [vmem:[#allocation5 + $0xe0] sm:$0xff]
        %v816 = vld [vmem:[#allocation5 + $0xe8] sm:$0xff]
        %v817 = vld [vmem:[#allocation5 + $0xf0] sm:$0xff]
        %v818 = vld [vmem:[#allocation5 + $0xf8] sm:$0xff]
        %v819 = vld [vmem:[%s2] sm:$0x3]
        %v821 = vlaneseq
        %v822 = vshrl.u32 %v821, 7
        %v823 = vsub.s32 0, %v822
        %v824 = vrot.slane %v819, %v823
        %v825 = vlaneseq
        %v826 = vshrl.u32 %v825, 7
        %v827 = vsub.s32 1, %v826
        %v828 = vrot.slane %v819, %v827
        %v863 = vunpack.c.l.b16 %v787
        %v864 = vunpack.c.h.b16 %v787
        %v865 = vunpack.c.l.b16 %v788
        %v866 = vunpack.c.h.b16 %v788
        %v867 = vunpack.c.l.b16 %v789
        %v868 = vunpack.c.h.b16 %v789
        %v869 = vunpack.c.l.b16 %v790
        %v870 = vunpack.c.h.b16 %v790
        %v871 = vunpack.c.l.b16 %v791
        %v872 = vunpack.c.h.b16 %v791
        %v873 = vunpack.c.l.b16 %v792
        %v874 = vunpack.c.h.b16 %v792
        %v875 = vunpack.c.l.b16 %v793
        %v876 = vunpack.c.h.b16 %v793
        %v877 = vunpack.c.l.b16 %v794
        %v878 = vunpack.c.h.b16 %v794
        %v879 = vunpack.c.l.b16 %v795
        %v880 = vunpack.c.h.b16 %v795
        %v881 = vunpack.c.l.b16 %v796
        %v882 = vunpack.c.h.b16 %v796
        %v883 = vunpack.c.l.b16 %v797
        %v884 = vunpack.c.h.b16 %v797
        %v885 = vunpack.c.l.b16 %v798
        %v886 = vunpack.c.h.b16 %v798
        %v887 = vunpack.c.l.b16 %v799
        %v888 = vunpack.c.h.b16 %v799
        %v889 = vunpack.c.l.b16 %v800
        %v890 = vunpack.c.h.b16 %v800
        %v891 = vunpack.c.l.b16 %v801
        %v892 = vunpack.c.h.b16 %v801
        %v893 = vunpack.c.l.b16 %v802
        %v894 = vunpack.c.h.b16 %v802
        %v895 = vunpack.c.l.b16 %v803
        %v896 = vunpack.c.h.b16 %v803
        %v897 = vunpack.c.l.b16 %v804
        %v898 = vunpack.c.h.b16 %v804
        %v899 = vunpack.c.l.b16 %v805
        %v900 = vunpack.c.h.b16 %v805
        %v901 = vunpack.c.l.b16 %v806
        %v902 = vunpack.c.h.b16 %v806
        %v903 = vunpack.c.l.b16 %v807
        %v904 = vunpack.c.h.b16 %v807
        %v905 = vunpack.c.l.b16 %v808
        %v906 = vunpack.c.h.b16 %v808
        %v907 = vunpack.c.l.b16 %v809
        %v908 = vunpack.c.h.b16 %v809
        %v909 = vunpack.c.l.b16 %v810
        %v910 = vunpack.c.h.b16 %v810
        %v911 = vunpack.c.l.b16 %v811
        %v912 = vunpack.c.h.b16 %v811
        %v913 = vunpack.c.l.b16 %v812
        %v914 = vunpack.c.h.b16 %v812
        %v915 = vunpack.c.l.b16 %v813
        %v916 = vunpack.c.h.b16 %v813
        %v917 = vunpack.c.l.b16 %v814
        %v918 = vunpack.c.h.b16 %v814
        %v919 = vunpack.c.l.b16 %v815
        %v920 = vunpack.c.h.b16 %v815
        %v921 = vunpack.c.l.b16 %v816
        %v922 = vunpack.c.h.b16 %v816
        %v923 = vunpack.c.l.b16 %v817
        %v924 = vunpack.c.h.b16 %v817
        %v925 = vunpack.c.l.b16 %v818
        %v926 = vunpack.c.h.b16 %v818
        %v927 = vpack.c.b16 %v865, %v863
        %v928 = vpack.c.b16 %v866, %v864
        %v929 = vpack.c.b16 %v869, %v867
        %v930 = vpack.c.b16 %v870, %v868
        %v931 = vpack.c.b16 %v873, %v871
        %v932 = vpack.c.b16 %v874, %v872
        %v933 = vpack.c.b16 %v877, %v875
        %v934 = vpack.c.b16 %v878, %v876
        %v935 = vpack.c.b16 %v881, %v879
        %v936 = vpack.c.b16 %v882, %v880
        %v937 = vpack.c.b16 %v885, %v883
        %v938 = vpack.c.b16 %v886, %v884
        %v939 = vpack.c.b16 %v889, %v887
        %v940 = vpack.c.b16 %v890, %v888
        %v941 = vpack.c.b16 %v893, %v891
        %v942 = vpack.c.b16 %v894, %v892
        %v943 = vpack.c.b16 %v897, %v895
        %v944 = vpack.c.b16 %v898, %v896
        %v945 = vpack.c.b16 %v901, %v899
        %v946 = vpack.c.b16 %v902, %v900
        %v947 = vpack.c.b16 %v905, %v903
        %v948 = vpack.c.b16 %v906, %v904
        %v949 = vpack.c.b16 %v909, %v907
        %v950 = vpack.c.b16 %v910, %v908
        %v951 = vpack.c.b16 %v913, %v911
        %v952 = vpack.c.b16 %v914, %v912
        %v953 = vpack.c.b16 %v917, %v915
        %v954 = vpack.c.b16 %v918, %v916
        %v955 = vpack.c.b16 %v921, %v919
        %v956 = vpack.c.b16 %v922, %v920
        %v957 = vpack.c.b16 %v925, %v923
        %v958 = vpack.c.b16 %v926, %v924
        %991 = vmatprep.subr.bf16.mxu0 %v928
        %992 = vmatpush1.bf16.msra.mxu0 %v927
        %993 = vmatprep.subr.bf16.mxu0 %v930
        %994 = vmatpush1.bf16.msra.mxu0 %v929
        %995 = vmatprep.subr.bf16.mxu0 %v932
        %996 = vmatpush1.bf16.msra.mxu0 %v931
        %997 = vmatprep.subr.bf16.mxu0 %v934
        %998 = vmatpush1.bf16.msra.mxu0 %v933
        %999 = vmatprep.subr.bf16.mxu0 %v936
        %1000 = vmatpush1.bf16.msra.mxu0 %v935
        %1001 = vmatprep.subr.bf16.mxu0 %v938
        %1002 = vmatpush1.bf16.msra.mxu0 %v937
        %1003 = vmatprep.subr.bf16.mxu0 %v940
        %1004 = vmatpush1.bf16.msra.mxu0 %v939
        %1005 = vmatprep.subr.bf16.mxu0 %v942
        %1006 = vmatpush1.bf16.msra.mxu0 %v941
        %1007 = vmatprep.subr.bf16.mxu0 %v944
        %1008 = vmatpush1.bf16.msra.mxu0 %v943
        %1009 = vmatprep.subr.bf16.mxu0 %v946
        %1010 = vmatpush1.bf16.msra.mxu0 %v945
        %1011 = vmatprep.subr.bf16.mxu0 %v948
        %1012 = vmatpush1.bf16.msra.mxu0 %v947
        %1013 = vmatprep.subr.bf16.mxu0 %v950
        %1014 = vmatpush1.bf16.msra.mxu0 %v949
        %1015 = vmatprep.subr.bf16.mxu0 %v952
        %1016 = vmatpush1.bf16.msra.mxu0 %v951
        %1017 = vmatprep.subr.bf16.mxu0 %v954
        %1018 = vmatpush1.bf16.msra.mxu0 %v953
        %1019 = vmatprep.subr.bf16.mxu0 %v956
        %1020 = vmatpush1.bf16.msra.mxu0 %v955
        %1021 = vmatprep.subr.bf16.mxu0 %v958
        %1022 = vmatpush1.bf16.msra.mxu0 %v957
        %1023 = vmatprep.mubr.bf16.mxu0 %v783
        %1024 = vmatmul.mubr.bf16.gmra.mrb[0].mxu0 %v773
        %v1025 = vpop.f32.mrb[0].mxu0
        %v1026 = vadd.f32 %v824, %v1025
        %v1027 = vpop.f32.mrb[0].mxu0
        %v1028 = vadd.f32 %v828, %v1027
        %v1029 = vpop.f32.mrb[0].mxu0
        %v1030 = vadd.f32 %v824, %v1029
        %v1031 = vpop.f32.mrb[0].mxu0
        %v1032 = vadd.f32 %v828, %v1031
        %1033 = vmatprep.mubr.bf16.mxu0 %v784
        %1034 = vmatmul.mubr.bf16.gmra.mrb[0].mxu0 %v774
        %v1035 = vpop.f32.mrb[0].mxu0
        %v1036 = vadd.f32 %v824, %v1035
        %v1037 = vpop.f32.mrb[0].mxu0
        %v1038 = vadd.f32 %v828, %v1037
        %v1039 = vpop.f32.mrb[0].mxu0
        %v1040 = vadd.f32 %v824, %v1039
        %v1041 = vpop.f32.mrb[0].mxu0
        %v1042 = vadd.f32 %v828, %v1041
        %1043 = vdwg.mxu0
        %v1044 = vmax.f32 %v1026, 0.0
        %v1045 = vmax.f32 %v1030, 0.0
        %v1046 = vmax.f32 %v1036, 0.0
        %v1047 = vmax.f32 %v1040, 0.0
        %v1048 = vrot.slane %v1044, 7
        %v1049 = vrot.slane %v1045, 7
        %v1050 = vrot.slane %v1046, 7
        %v1051 = vrot.slane %v1047, 7
        %v1052 = vsel %vm752, %v1050, %v1051
        %v1053 = vsel %vm752, %v1049, %v1050
        %v1054 = vsel %vm752, %v1048, %v1049
        %v1055 = vsel %vm752, %v1051, %v1048
        %v1056 = vsel %vm765, %v1055, 0.0
        %v1057 = vsel %vm766, %v1054, 0.0
        %v1058 = vsel %vm767, %v1053, 0.0
        %v1059 = vsel %vm768, %v1052, 0.0
        %v1060 = vpack.c.bf16 %v1057, %v1056
        %v1061 = vpack.c.bf16 %v1059, %v1058
        %v1062 = vpack.c.bf16 %v1045, %v1044
        %v1063 = vpack.c.bf16 %v1047, %v1046
        %v1064 = vld [vmem:[#allocation7] sm:$0xf]
        %v1065 = vld [vmem:[#allocation7 + $0x4] sm:$0xf]
        %v1066 = vld [vmem:[#allocation7 + $0x8] sm:$0xf]
        %v1067 = vld [vmem:[#allocation7 + $0xc] sm:$0xf]
        %v1068 = vld [vmem:[#allocation7 + $0x10] sm:$0xf]
        %v1069 = vld [vmem:[#allocation7 + $0x14] sm:$0xf]
        %v1070 = vld [vmem:[#allocation7 + $0x18] sm:$0xf]
        %v1071 = vld [vmem:[#allocation7 + $0x1c] sm:$0xf]
        %v1072 = vld [vmem:[#allocation7 + $0x20] sm:$0xf]
        %v1073 = vld [vmem:[#allocation7 + $0x24] sm:$0xf]
        %v1074 = vld [vmem:[#allocation7 + $0x28] sm:$0xf]
        %v1075 = vld [vmem:[#allocation7 + $0x2c] sm:$0xf]
        %v1076 = vld [vmem:[#allocation7 + $0x30] sm:$0xf]
        %v1077 = vld [vmem:[#allocation7 + $0x34] sm:$0xf]
        %v1078 = vld [vmem:[#allocation7 + $0x38] sm:$0xf]
        %v1079 = vld [vmem:[#allocation7 + $0x3c] sm:$0xf]
        %v1080 = vld [vmem:[#allocation7 + $0x40] sm:$0xf]
        %v1081 = vld [vmem:[#allocation7 + $0x44] sm:$0xf]
        %v1082 = vld [vmem:[#allocation7 + $0x48] sm:$0xf]
        %v1083 = vld [vmem:[#allocation7 + $0x4c] sm:$0xf]
        %v1084 = vld [vmem:[#allocation7 + $0x50] sm:$0xf]
        %v1085 = vld [vmem:[#allocation7 + $0x54] sm:$0xf]
        %v1086 = vld [vmem:[#allocation7 + $0x58] sm:$0xf]
        %v1087 = vld [vmem:[#allocation7 + $0x5c] sm:$0xf]
        %v1088 = vld [vmem:[#allocation7 + $0x60] sm:$0xf]
        %v1089 = vld [vmem:[#allocation7 + $0x64] sm:$0xf]
        %v1090 = vld [vmem:[#allocation7 + $0x68] sm:$0xf]
        %v1091 = vld [vmem:[#allocation7 + $0x6c] sm:$0xf]
        %v1092 = vld [vmem:[#allocation7 + $0x70] sm:$0xf]
        %v1093 = vld [vmem:[#allocation7 + $0x74] sm:$0xf]
        %v1094 = vld [vmem:[#allocation7 + $0x78] sm:$0xf]
        %v1095 = vld [vmem:[#allocation7 + $0x7c] sm:$0xf]
        %v1096 = vld [vmem:[%s4] sm:$0x1]
        %v1098 = vlaneseq
        %v1099 = vshrl.u32 %v1098, 7
        %v1100 = vsub.s32 0, %v1099
        %v1101 = vrot.slane %v1096, %v1100
        %v1135 = vunpack.c.l.b16 %v1064
        %v1136 = vunpack.c.l.b16 %v1065
        %v1137 = vunpack.c.l.b16 %v1066
        %v1138 = vunpack.c.l.b16 %v1067
        %v1139 = vunpack.c.l.b16 %v1068
        %v1140 = vunpack.c.l.b16 %v1069
        %v1141 = vunpack.c.l.b16 %v1070
        %v1142 = vunpack.c.l.b16 %v1071
        %v1143 = vunpack.c.l.b16 %v1072
        %v1144 = vunpack.c.l.b16 %v1073
        %v1145 = vunpack.c.l.b16 %v1074
        %v1146 = vunpack.c.l.b16 %v1075
        %v1147 = vunpack.c.l.b16 %v1076
        %v1148 = vunpack.c.l.b16 %v1077
        %v1149 = vunpack.c.l.b16 %v1078
        %v1150 = vunpack.c.l.b16 %v1079
        %v1151 = vunpack.c.l.b16 %v1080
        %v1152 = vunpack.c.l.b16 %v1081
        %v1153 = vunpack.c.l.b16 %v1082
        %v1154 = vunpack.c.l.b16 %v1083
        %v1155 = vunpack.c.l.b16 %v1084
        %v1156 = vunpack.c.l.b16 %v1085
        %v1157 = vunpack.c.l.b16 %v1086
        %v1158 = vunpack.c.l.b16 %v1087
        %v1159 = vunpack.c.l.b16 %v1088
        %v1160 = vunpack.c.l.b16 %v1089
        %v1161 = vunpack.c.l.b16 %v1090
        %v1162 = vunpack.c.l.b16 %v1091
        %v1163 = vunpack.c.l.b16 %v1092
        %v1164 = vunpack.c.l.b16 %v1093
        %v1165 = vunpack.c.l.b16 %v1094
        %v1166 = vunpack.c.l.b16 %v1095
        %v1167 = vpack.c.b16 %v1136, %v1135
        %v1168 = vpack.c.b16 %v1138, %v1137
        %v1169 = vpack.c.b16 %v1140, %v1139
        %v1170 = vpack.c.b16 %v1142, %v1141
        %v1171 = vpack.c.b16 %v1144, %v1143
        %v1172 = vpack.c.b16 %v1146, %v1145
        %v1173 = vpack.c.b16 %v1148, %v1147
        %v1174 = vpack.c.b16 %v1150, %v1149
        %v1175 = vpack.c.b16 %v1152, %v1151
        %v1176 = vpack.c.b16 %v1154, %v1153
        %v1177 = vpack.c.b16 %v1156, %v1155
        %v1178 = vpack.c.b16 %v1158, %v1157
        %v1179 = vpack.c.b16 %v1160, %v1159
        %v1180 = vpack.c.b16 %v1162, %v1161
        %v1181 = vpack.c.b16 %v1164, %v1163
        %v1182 = vpack.c.b16 %v1166, %v1165
        %1199 = vmatprep.subr.bf16.mxu0 0
        %1200 = vmatpush1.bf16.msra.mxu0 %v1167
        %1201 = vmatprep.subr.bf16.mxu0 0
        %1202 = vmatpush1.bf16.msra.mxu0 %v1168
        %1203 = vmatprep.subr.bf16.mxu0 0
        %1204 = vmatpush1.bf16.msra.mxu0 %v1169
        %1205 = vmatprep.subr.bf16.mxu0 0
        %1206 = vmatpush1.bf16.msra.mxu0 %v1170
        %1207 = vmatprep.subr.bf16.mxu0 0
        %1208 = vmatpush1.bf16.msra.mxu0 %v1171
        %1209 = vmatprep.subr.bf16.mxu0 0
        %1210 = vmatpush1.bf16.msra.mxu0 %v1172
        %1211 = vmatprep.subr.bf16.mxu0 0
        %1212 = vmatpush1.bf16.msra.mxu0 %v1173
        %1213 = vmatprep.subr.bf16.mxu0 0
        %1214 = vmatpush1.bf16.msra.mxu0 %v1174
        %1215 = vmatprep.subr.bf16.mxu0 0
        %1216 = vmatpush1.bf16.msra.mxu0 %v1175
        %1217 = vmatprep.subr.bf16.mxu0 0
        %1218 = vmatpush1.bf16.msra.mxu0 %v1176
        %1219 = vmatprep.subr.bf16.mxu0 0
        %1220 = vmatpush1.bf16.msra.mxu0 %v1177
        %1221 = vmatprep.subr.bf16.mxu0 0
        %1222 = vmatpush1.bf16.msra.mxu0 %v1178
        %1223 = vmatprep.subr.bf16.mxu0 0
        %1224 = vmatpush1.bf16.msra.mxu0 %v1179
        %1225 = vmatprep.subr.bf16.mxu0 0
        %1226 = vmatpush1.bf16.msra.mxu0 %v1180
        %1227 = vmatprep.subr.bf16.mxu0 0
        %1228 = vmatpush1.bf16.msra.mxu0 %v1181
        %1229 = vmatprep.subr.bf16.mxu0 0
        %1230 = vmatpush1.bf16.msra.mxu0 %v1182
        %1231 = vmatprep.mubr.bf16.mxu0 %v1062
        %1232 = vmatmul.mubr.bf16.gmra.mrb[0].mxu0 %v1060
        %v1233 = vpop.f32.mrb[0].mxu0
        %v1234 = vadd.f32 %v1101, %v1233
        %v1235 = vpop.f32.mrb[0].mxu0
        %v1236 = vpop.f32.mrb[0].mxu0
        %v1237 = vadd.f32 %v1101, %v1236
        %v1238 = vpop.f32.mrb[0].mxu0
        %1239 = vmatprep.mubr.bf16.mxu0 %v1063
        %1240 = vmatmul.mubr.bf16.gmra.mrb[0].mxu0 %v1061
        %v1241 = vpop.f32.mrb[0].mxu0
        %v1242 = vadd.f32 %v1101, %v1241
        %v1243 = vpop.f32.mrb[0].mxu0
        %v1244 = vpop.f32.mrb[0].mxu0
        %v1245 = vadd.f32 %v1101, %v1244
        %v1246 = vpop.f32.mrb[0].mxu0
        %1247 = vdwg.mxu0
        %v1248 = vmax.f32 %v1234, 0.0
        %v1249 = vmax.f32 %v1237, 0.0
        %v1250 = vmax.f32 %v1242, 0.0
        %v1251 = vmax.f32 %v1245, 0.0
        %v1252 = vadd.f32 %v1248, %v1028
        %v1253 = vadd.f32 %v1249, %v1032
        %v1254 = vadd.f32 %v1250, %v1038
        %v1255 = vadd.f32 %v1251, %v1042
        %v1256 = vmax.f32 %v1252, 0.0
        %v1257 = vmax.f32 %v1253, 0.0
        %v1258 = vmax.f32 %v1254, 0.0
        %v1259 = vmax.f32 %v1255, 0.0
        %v1260 = vrot.slane %v1256, 6
        %v1261 = vrot.slane %v1257, 6
        %v1262 = vrot.slane %v1258, 6
        %v1263 = vrot.slane %v1259, 6
        %vm1264 = vcmp.lt.s32.totalorder %v696, 2
        %v1265 = vsel %vm1264, %v1262, %v1263
        %v1266 = vsel %vm1264, %v1261, %v1262
        %v1267 = vsel %vm1264, %v1260, %v1261
        %v1268 = vsel %vm1264, %v1263, %v1260
        %vm1269 = vcmp.ge.s32.totalorder %v744, 2
        %vm1270 = vcmp.ge.s32.totalorder %v745, 2
        %vm1271 = vcmp.ge.s32.totalorder %v746, 2
        %vm1272 = vcmp.ge.s32.totalorder %v747, 2
        %v1273 = vsel %vm1269, 1, 0
        %v1274 = vsel %vm1270, 1, 0
        %v1275 = vsel %vm1271, 1, 0
        %v1276 = vsel %vm1272, 1, 0
        %vm1277 = vcmp.eq.s32.totalorder %v1273, 1
        %vm1278 = vcmp.eq.s32.totalorder %v1274, 1
        %vm1279 = vcmp.eq.s32.totalorder %v1275, 1
        %vm1280 = vcmp.eq.s32.totalorder %v1276, 1
        %v1281 = vsel %vm1277, %v1268, 0.0
        %v1282 = vsel %vm1278, %v1267, 0.0
        %v1283 = vsel %vm1279, %v1266, 0.0
        %v1284 = vsel %vm1280, %v1265, 0.0
        %v1285 = vpack.c.bf16 %v1282, %v1281
        %v1286 = vpack.c.bf16 %v1284, %v1283
        %v1287 = vpack.c.bf16 %v1257, %v1256
        %v1288 = vpack.c.bf16 %v1259, %v1258
        %v1289 = vld [vmem:[#allocation8] sm:$0xf]
        %v1290 = vld [vmem:[#allocation8 + $0x4] sm:$0xf]
        %v1291 = vld [vmem:[#allocation8 + $0x8] sm:$0xf]
        %v1292 = vld [vmem:[#allocation8 + $0xc] sm:$0xf]
        %v1293 = vld [vmem:[#allocation8 + $0x10] sm:$0xf]
        %v1294 = vld [vmem:[#allocation8 + $0x14] sm:$0xf]
        %v1295 = vld [vmem:[#allocation8 + $0x18] sm:$0xf]
        %v1296 = vld [vmem:[#allocation8 + $0x1c] sm:$0xf]
        %v1297 = vld [vmem:[#allocation8 + $0x20] sm:$0xf]
        %v1298 = vld [vmem:[#allocation8 + $0x24] sm:$0xf]
        %v1299 = vld [vmem:[#allocation8 + $0x28] sm:$0xf]
        %v1300 = vld [vmem:[#allocation8 + $0x2c] sm:$0xf]
        %v1301 = vld [vmem:[#allocation8 + $0x30] sm:$0xf]
        %v1302 = vld [vmem:[#allocation8 + $0x34] sm:$0xf]
        %v1303 = vld [vmem:[#allocation8 + $0x38] sm:$0xf]
        %v1304 = vld [vmem:[#allocation8 + $0x3c] sm:$0xf]
        %v1305 = vld [vmem:[#allocation8 + $0x40] sm:$0xf]
        %v1306 = vld [vmem:[#allocation8 + $0x44] sm:$0xf]
        %v1307 = vld [vmem:[#allocation8 + $0x48] sm:$0xf]
        %v1308 = vld [vmem:[#allocation8 + $0x4c] sm:$0xf]
        %v1309 = vld [vmem:[#allocation8 + $0x50] sm:$0xf]
        %v1310 = vld [vmem:[#allocation8 + $0x54] sm:$0xf]
        %v1311 = vld [vmem:[#allocation8 + $0x58] sm:$0xf]
        %v1312 = vld [vmem:[#allocation8 + $0x5c] sm:$0xf]
        %v1313 = vld [vmem:[#allocation8 + $0x60] sm:$0xf]
        %v1314 = vld [vmem:[#allocation8 + $0x64] sm:$0xf]
        %v1315 = vld [vmem:[#allocation8 + $0x68] sm:$0xf]
        %v1316 = vld [vmem:[#allocation8 + $0x6c] sm:$0xf]
        %v1317 = vld [vmem:[#allocation8 + $0x70] sm:$0xf]
        %v1318 = vld [vmem:[#allocation8 + $0x74] sm:$0xf]
        %v1319 = vld [vmem:[#allocation8 + $0x78] sm:$0xf]
        %v1320 = vld [vmem:[#allocation8 + $0x7c] sm:$0xf]
        %v1321 = vld [vmem:[%s6] sm:$0x1]
        %v1323 = vlaneseq
        %v1324 = vshrl.u32 %v1323, 7
        %v1325 = vsub.s32 0, %v1324
        %v1326 = vrot.slane %v1321, %v1325
        %v1360 = vunpack.c.l.b16 %v1289
        %v1361 = vunpack.c.l.b16 %v1290
        %v1362 = vunpack.c.l.b16 %v1291
        %v1363 = vunpack.c.l.b16 %v1292
        %v1364 = vunpack.c.l.b16 %v1293
        %v1365 = vunpack.c.l.b16 %v1294
        %v1366 = vunpack.c.l.b16 %v1295
        %v1367 = vunpack.c.l.b16 %v1296
        %v1368 = vunpack.c.l.b16 %v1297
        %v1369 = vunpack.c.l.b16 %v1298
        %v1370 = vunpack.c.l.b16 %v1299
        %v1371 = vunpack.c.l.b16 %v1300
        %v1372 = vunpack.c.l.b16 %v1301
        %v1373 = vunpack.c.l.b16 %v1302
        %v1374 = vunpack.c.l.b16 %v1303
        %v1375 = vunpack.c.l.b16 %v1304
        %v1376 = vunpack.c.l.b16 %v1305
        %v1377 = vunpack.c.l.b16 %v1306
        %v1378 = vunpack.c.l.b16 %v1307
        %v1379 = vunpack.c.l.b16 %v1308
        %v1380 = vunpack.c.l.b16 %v1309
        %v1381 = vunpack.c.l.b16 %v1310
        %v1382 = vunpack.c.l.b16 %v1311
        %v1383 = vunpack.c.l.b16 %v1312
        %v1384 = vunpack.c.l.b16 %v1313
        %v1385 = vunpack.c.l.b16 %v1314
        %v1386 = vunpack.c.l.b16 %v1315
        %v1387 = vunpack.c.l.b16 %v1316
        %v1388 = vunpack.c.l.b16 %v1317
        %v1389 = vunpack.c.l.b16 %v1318
        %v1390 = vunpack.c.l.b16 %v1319
        %v1391 = vunpack.c.l.b16 %v1320
        %v1392 = vpack.c.b16 %v1361, %v1360
        %v1393 = vpack.c.b16 %v1363, %v1362
        %v1394 = vpack.c.b16 %v1365, %v1364
        %v1395 = vpack.c.b16 %v1367, %v1366
        %v1396 = vpack.c.b16 %v1369, %v1368
        %v1397 = vpack.c.b16 %v1371, %v1370
        %v1398 = vpack.c.b16 %v1373, %v1372
        %v1399 = vpack.c.b16 %v1375, %v1374
        %v1400 = vpack.c.b16 %v1377, %v1376
        %v1401 = vpack.c.b16 %v1379, %v1378
        %v1402 = vpack.c.b16 %v1381, %v1380
        %v1403 = vpack.c.b16 %v1383, %v1382
        %v1404 = vpack.c.b16 %v1385, %v1384
        %v1405 = vpack.c.b16 %v1387, %v1386
        %v1406 = vpack.c.b16 %v1389, %v1388
        %v1407 = vpack.c.b16 %v1391, %v1390
        %1424 = vmatprep.subr.bf16.mxu0 0
        %1425 = vmatpush1.bf16.msra.mxu0 %v1392
        %1426 = vmatprep.subr.bf16.mxu0 0
        %1427 = vmatpush1.bf16.msra.mxu0 %v1393
        %1428 = vmatprep.subr.bf16.mxu0 0
        %1429 = vmatpush1.bf16.msra.mxu0 %v1394
        %1430 = vmatprep.subr.bf16.mxu0 0
        %1431 = vmatpush1.bf16.msra.mxu0 %v1395
        %1432 = vmatprep.subr.bf16.mxu0 0
        %1433 = vmatpush1.bf16.msra.mxu0 %v1396
        %1434 = vmatprep.subr.bf16.mxu0 0
        %1435 = vmatpush1.bf16.msra.mxu0 %v1397
        %1436 = vmatprep.subr.bf16.mxu0 0
        %1437 = vmatpush1.bf16.msra.mxu0 %v1398
        %1438 = vmatprep.subr.bf16.mxu0 0
        %1439 = vmatpush1.bf16.msra.mxu0 %v1399
        %1440 = vmatprep.subr.bf16.mxu0 0
        %1441 = vmatpush1.bf16.msra.mxu0 %v1400
        %1442 = vmatprep.subr.bf16.mxu0 0
        %1443 = vmatpush1.bf16.msra.mxu0 %v1401
        %1444 = vmatprep.subr.bf16.mxu0 0
        %1445 = vmatpush1.bf16.msra.mxu0 %v1402
        %1446 = vmatprep.subr.bf16.mxu0 0
        %1447 = vmatpush1.bf16.msra.mxu0 %v1403
        %1448 = vmatprep.subr.bf16.mxu0 0
        %1449 = vmatpush1.bf16.msra.mxu0 %v1404
        %1450 = vmatprep.subr.bf16.mxu0 0
        %1451 = vmatpush1.bf16.msra.mxu0 %v1405
        %1452 = vmatprep.subr.bf16.mxu0 0
        %1453 = vmatpush1.bf16.msra.mxu0 %v1406
        %1454 = vmatprep.subr.bf16.mxu0 0
        %1455 = vmatpush1.bf16.msra.mxu0 %v1407
        %1456 = vmatprep.mubr.bf16.mxu0 %v1287
        %1457 = vmatmul.mubr.bf16.gmra.mrb[0].mxu0 %v1285
        %v1458 = vpop.f32.mrb[0].mxu0
        %v1459 = vadd.f32 %v1326, %v1458
        %v1460 = vpop.f32.mrb[0].mxu0
        %v1461 = vpop.f32.mrb[0].mxu0
        %v1462 = vadd.f32 %v1326, %v1461
        %v1463 = vpop.f32.mrb[0].mxu0
        %1464 = vmatprep.mubr.bf16.mxu0 %v1288
        %1465 = vmatmul.mubr.bf16.gmra.mrb[0].mxu0 %v1286
        %v1466 = vpop.f32.mrb[0].mxu0
        %v1467 = vadd.f32 %v1326, %v1466
        %v1468 = vpop.f32.mrb[0].mxu0
        %v1469 = vpop.f32.mrb[0].mxu0
        %v1470 = vadd.f32 %v1326, %v1469
        %v1471 = vpop.f32.mrb[0].mxu0
        %1472 = vdwg.mxu0
        %v1473 = vmax.f32 %v1459, 0.0
        %v1474 = vmax.f32 %v1462, 0.0
        %v1475 = vmax.f32 %v1467, 0.0
        %v1476 = vmax.f32 %v1470, 0.0
        %v1477 = vrot.slane %v1473, 6
        %v1478 = vrot.slane %v1474, 6
        %v1479 = vrot.slane %v1475, 6
        %v1480 = vrot.slane %v1476, 6
        %v1481 = vsel %vm1264, %v1479, %v1480
        %v1482 = vsel %vm1264, %v1478, %v1479
        %v1483 = vsel %vm1264, %v1477, %v1478
        %v1484 = vsel %vm1264, %v1480, %v1477
        %v1485 = vsel %vm1277, %v1484, 0.0
        %v1486 = vsel %vm1278, %v1483, 0.0
        %v1487 = vsel %vm1279, %v1482, 0.0
        %v1488 = vsel %vm1280, %v1481, 0.0
        %v1489 = vpack.c.bf16 %v1486, %v1485
        %v1490 = vpack.c.bf16 %v1488, %v1487
        %v1491 = vpack.c.bf16 %v1474, %v1473
        %v1492 = vpack.c.bf16 %v1476, %v1475
        %v1493 = vld [vmem:[#allocation10] sm:$0xf]
        %v1494 = vld [vmem:[#allocation10 + $0x4] sm:$0xf]
        %v1495 = vld [vmem:[#allocation10 + $0x8] sm:$0xf]
        %v1496 = vld [vmem:[#allocation10 + $0xc] sm:$0xf]
        %v1497 = vld [vmem:[#allocation10 + $0x10] sm:$0xf]
        %v1498 = vld [vmem:[#allocation10 + $0x14] sm:$0xf]
        %v1499 = vld [vmem:[#allocation10 + $0x18] sm:$0xf]
        %v1500 = vld [vmem:[#allocation10 + $0x1c] sm:$0xf]
        %v1501 = vld [vmem:[#allocation10 + $0x20] sm:$0xf]
        %v1502 = vld [vmem:[#allocation10 + $0x24] sm:$0xf]
        %v1503 = vld [vmem:[#allocation10 + $0x28] sm:$0xf]
        %v1504 = vld [vmem:[#allocation10 + $0x2c] sm:$0xf]
        %v1505 = vld [vmem:[#allocation10 + $0x30] sm:$0xf]
        %v1506 = vld [vmem:[#allocation10 + $0x34] sm:$0xf]
        %v1507 = vld [vmem:[#allocation10 + $0x38] sm:$0xf]
        %v1508 = vld [vmem:[#allocation10 + $0x3c] sm:$0xf]
        %v1509 = vld [vmem:[#allocation10 + $0x40] sm:$0xf]
        %v1510 = vld [vmem:[#allocation10 + $0x44] sm:$0xf]
        %v1511 = vld [vmem:[#allocation10 + $0x48] sm:$0xf]
        %v1512 = vld [vmem:[#allocation10 + $0x4c] sm:$0xf]
        %v1513 = vld [vmem:[#allocation10 + $0x50] sm:$0xf]
        %v1514 = vld [vmem:[#allocation10 + $0x54] sm:$0xf]
        %v1515 = vld [vmem:[#allocation10 + $0x58] sm:$0xf]
        %v1516 = vld [vmem:[#allocation10 + $0x5c] sm:$0xf]
        %v1517 = vld [vmem:[#allocation10 + $0x60] sm:$0xf]
        %v1518 = vld [vmem:[#allocation10 + $0x64] sm:$0xf]
        %v1519 = vld [vmem:[#allocation10 + $0x68] sm:$0xf]
        %v1520 = vld [vmem:[#allocation10 + $0x6c] sm:$0xf]
        %v1521 = vld [vmem:[#allocation10 + $0x70] sm:$0xf]
        %v1522 = vld [vmem:[#allocation10 + $0x74] sm:$0xf]
        %v1523 = vld [vmem:[#allocation10 + $0x78] sm:$0xf]
        %v1524 = vld [vmem:[#allocation10 + $0x7c] sm:$0xf]
        %v1525 = vld [vmem:[%s8] sm:$0x1]
        %v1527 = vlaneseq
        %v1528 = vshrl.u32 %v1527, 7
        %v1529 = vsub.s32 0, %v1528
        %v1530 = vrot.slane %v1525, %v1529
        %v1564 = vunpack.c.l.b16 %v1493
        %v1565 = vunpack.c.l.b16 %v1494
        %v1566 = vunpack.c.l.b16 %v1495
        %v1567 = vunpack.c.l.b16 %v1496
        %v1568 = vunpack.c.l.b16 %v1497
        %v1569 = vunpack.c.l.b16 %v1498
        %v1570 = vunpack.c.l.b16 %v1499
        %v1571 = vunpack.c.l.b16 %v1500
        %v1572 = vunpack.c.l.b16 %v1501
        %v1573 = vunpack.c.l.b16 %v1502
        %v1574 = vunpack.c.l.b16 %v1503
        %v1575 = vunpack.c.l.b16 %v1504
        %v1576 = vunpack.c.l.b16 %v1505
        %v1577 = vunpack.c.l.b16 %v1506
        %v1578 = vunpack.c.l.b16 %v1507
        %v1579 = vunpack.c.l.b16 %v1508
        %v1580 = vunpack.c.l.b16 %v1509
        %v1581 = vunpack.c.l.b16 %v1510
        %v1582 = vunpack.c.l.b16 %v1511
        %v1583 = vunpack.c.l.b16 %v1512
        %v1584 = vunpack.c.l.b16 %v1513
        %v1585 = vunpack.c.l.b16 %v1514
        %v1586 = vunpack.c.l.b16 %v1515
        %v1587 = vunpack.c.l.b16 %v1516
        %v1588 = vunpack.c.l.b16 %v1517
        %v1589 = vunpack.c.l.b16 %v1518
        %v1590 = vunpack.c.l.b16 %v1519
        %v1591 = vunpack.c.l.b16 %v1520
        %v1592 = vunpack.c.l.b16 %v1521
        %v1593 = vunpack.c.l.b16 %v1522
        %v1594 = vunpack.c.l.b16 %v1523
        %v1595 = vunpack.c.l.b16 %v1524
        %v1596 = vpack.c.b16 %v1565, %v1564
        %v1597 = vpack.c.b16 %v1567, %v1566
        %v1598 = vpack.c.b16 %v1569, %v1568
        %v1599 = vpack.c.b16 %v1571, %v1570
        %v1600 = vpack.c.b16 %v1573, %v1572
        %v1601 = vpack.c.b16 %v1575, %v1574
        %v1602 = vpack.c.b16 %v1577, %v1576
        %v1603 = vpack.c.b16 %v1579, %v1578
        %v1604 = vpack.c.b16 %v1581, %v1580
        %v1605 = vpack.c.b16 %v1583, %v1582
        %v1606 = vpack.c.b16 %v1585, %v1584
        %v1607 = vpack.c.b16 %v1587, %v1586
        %v1608 = vpack.c.b16 %v1589, %v1588
        %v1609 = vpack.c.b16 %v1591, %v1590
        %v1610 = vpack.c.b16 %v1593, %v1592
        %v1611 = vpack.c.b16 %v1595, %v1594
        %1628 = vmatprep.subr.bf16.mxu0 0
        %1629 = vmatpush1.bf16.msra.mxu0 %v1596
        %1630 = vmatprep.subr.bf16.mxu0 0
        %1631 = vmatpush1.bf16.msra.mxu0 %v1597
        %1632 = vmatprep.subr.bf16.mxu0 0
        %1633 = vmatpush1.bf16.msra.mxu0 %v1598
        %1634 = vmatprep.subr.bf16.mxu0 0
        %1635 = vmatpush1.bf16.msra.mxu0 %v1599
        %1636 = vmatprep.subr.bf16.mxu0 0
        %1637 = vmatpush1.bf16.msra.mxu0 %v1600
        %1638 = vmatprep.subr.bf16.mxu0 0
        %1639 = vmatpush1.bf16.msra.mxu0 %v1601
        %1640 = vmatprep.subr.bf16.mxu0 0
        %1641 = vmatpush1.bf16.msra.mxu0 %v1602
        %1642 = vmatprep.subr.bf16.mxu0 0
        %1643 = vmatpush1.bf16.msra.mxu0 %v1603
        %1644 = vmatprep.subr.bf16.mxu0 0
        %1645 = vmatpush1.bf16.msra.mxu0 %v1604
        %1646 = vmatprep.subr.bf16.mxu0 0
        %1647 = vmatpush1.bf16.msra.mxu0 %v1605
        %1648 = vmatprep.subr.bf16.mxu0 0
        %1649 = vmatpush1.bf16.msra.mxu0 %v1606
        %1650 = vmatprep.subr.bf16.mxu0 0
        %1651 = vmatpush1.bf16.msra.mxu0 %v1607
        %1652 = vmatprep.subr.bf16.mxu0 0
        %1653 = vmatpush1.bf16.msra.mxu0 %v1608
        %1654 = vmatprep.subr.bf16.mxu0 0
        %1655 = vmatpush1.bf16.msra.mxu0 %v1609
        %1656 = vmatprep.subr.bf16.mxu0 0
        %1657 = vmatpush1.bf16.msra.mxu0 %v1610
        %1658 = vmatprep.subr.bf16.mxu0 0
        %1659 = vmatpush1.bf16.msra.mxu0 %v1611
        %1660 = vmatprep.mubr.bf16.mxu0 %v1491
        %1661 = vmatmul.mubr.bf16.gmra.mrb[0].mxu0 %v1489
        %v1662 = vpop.f32.mrb[0].mxu0
        %v1663 = vadd.f32 %v1530, %v1662
        %v1664 = vpop.f32.mrb[0].mxu0
        %v1665 = vpop.f32.mrb[0].mxu0
        %v1666 = vadd.f32 %v1530, %v1665
        %v1667 = vpop.f32.mrb[0].mxu0
        %1668 = vmatprep.mubr.bf16.mxu0 %v1492
        %1669 = vmatmul.mubr.bf16.gmra.mrb[0].mxu0 %v1490
        %v1670 = vpop.f32.mrb[0].mxu0
        %v1671 = vadd.f32 %v1530, %v1670
        %v1672 = vpop.f32.mrb[0].mxu0
        %v1673 = vpop.f32.mrb[0].mxu0
        %v1674 = vadd.f32 %v1530, %v1673
        %v1675 = vpop.f32.mrb[0].mxu0
        %1676 = vdwg.mxu0
        %v1677 = vmax.f32 %v1663, 0.0
        %v1678 = vmax.f32 %v1666, 0.0
        %v1679 = vmax.f32 %v1671, 0.0
        %v1680 = vmax.f32 %v1674, 0.0
        %v1681 = vadd.f32 %v1677, %v1256
        %v1682 = vadd.f32 %v1678, %v1257
        %v1683 = vadd.f32 %v1679, %v1258
        %v1684 = vadd.f32 %v1680, %v1259
        %v1685 = vmax.f32 %v1681, 0.0
        %v1686 = vmax.f32 %v1682, 0.0
        %v1687 = vmax.f32 %v1683, 0.0
        %v1688 = vmax.f32 %v1684, 0.0
        %v1689 = vrot.slane %v1685, 4
        %v1690 = vrot.slane %v1686, 4
        %v1691 = vrot.slane %v1687, 4
        %v1692 = vrot.slane %v1688, 4
        %vm1693 = vcmp.lt.s32.totalorder %v696, 4
        %v1694 = vsel %vm1693, %v1691, %v1692
        %v1695 = vsel %vm1693, %v1690, %v1691
        %v1696 = vsel %vm1693, %v1689, %v1690
        %v1697 = vsel %vm1693, %v1692, %v1689
        %vm1698 = vcmp.ge.s32.totalorder %v744, 4
        %vm1699 = vcmp.ge.s32.totalorder %v745, 4
        %vm1700 = vcmp.ge.s32.totalorder %v746, 4
        %vm1701 = vcmp.ge.s32.totalorder %v747, 4
        %v1702 = vsel %vm1698, 1, 0
        %v1703 = vsel %vm1699, 1, 0
        %v1704 = vsel %vm1700, 1, 0
        %v1705 = vsel %vm1701, 1, 0
        %vm1706 = vcmp.eq.s32.totalorder %v1702, 1
        %vm1707 = vcmp.eq.s32.totalorder %v1703, 1
        %vm1708 = vcmp.eq.s32.totalorder %v1704, 1
        %vm1709 = vcmp.eq.s32.totalorder %v1705, 1
        %v1710 = vsel %vm1706, %v1697, 0.0
        %v1711 = vsel %vm1707, %v1696, 0.0
        %v1712 = vsel %vm1708, %v1695, 0.0
        %v1713 = vsel %vm1709, %v1694, 0.0
        %v1714 = vpack.c.bf16 %v1711, %v1710
        %v1715 = vpack.c.bf16 %v1713, %v1712
        %v1716 = vpack.c.bf16 %v1686, %v1685
        %v1717 = vpack.c.bf16 %v1688, %v1687
        %v1718 = vld [vmem:[#allocation11] sm:$0xff]
        %v1719 = vld [vmem:[#allocation11 + $0x8] sm:$0xff]
        %v1720 = vld [vmem:[#allocation11 + $0x10] sm:$0xff]
        %v1721 = vld [vmem:[#allocation11 + $0x18] sm:$0xff]
        %v1722 = vld [vmem:[#allocation11 + $0x20] sm:$0xff]
        %v1723 = vld [vmem:[#allocation11 + $0x28] sm:$0xff]
        %v1724 = vld [vmem:[#allocation11 + $0x30] sm:$0xff]
        %v1725 = vld [vmem:[#allocation11 + $0x38] sm:$0xff]
        %v1726 = vld [vmem:[#allocation11 + $0x40] sm:$0xff]
        %v1727 = vld [vmem:[#allocation11 + $0x48] sm:$0xff]
        %v1728 = vld [vmem:[#allocation11 + $0x50] sm:$0xff]
        %v1729 = vld [vmem:[#allocation11 + $0x58] sm:$0xff]
        %v1730 = vld [vmem:[#allocation11 + $0x60] sm:$0xff]
        %v1731 = vld [vmem:[#allocation11 + $0x68] sm:$0xff]
        %v1732 = vld [vmem:[#allocation11 + $0x70] sm:$0xff]
        %v1733 = vld [vmem:[#allocation11 + $0x78] sm:$0xff]
        %v1734 = vld [vmem:[#allocation11 + $0x80] sm:$0xff]
        %v1735 = vld [vmem:[#allocation11 + $0x88] sm:$0xff]
        %v1736 = vld [vmem:[#allocation11 + $0x90] sm:$0xff]
        %v1737 = vld [vmem:[#allocation11 + $0x98] sm:$0xff]
        %v1738 = vld [vmem:[#allocation11 + $0xa0] sm:$0xff]
        %v1739 = vld [vmem:[#allocation11 + $0xa8] sm:$0xff]
        %v1740 = vld [vmem:[#allocation11 + $0xb0] sm:$0xff]
        %v1741 = vld [vmem:[#allocation11 + $0xb8] sm:$0xff]
        %v1742 = vld [vmem:[#allocation11 + $0xc0] sm:$0xff]
        %v1743 = vld [vmem:[#allocation11 + $0xc8] sm:$0xff]
        %v1744 = vld [vmem:[#allocation11 + $0xd0] sm:$0xff]
        %v1745 = vld [vmem:[#allocation11 + $0xd8] sm:$0xff]
        %v1746 = vld [vmem:[#allocation11 + $0xe0] sm:$0xff]
        %v1747 = vld [vmem:[#allocation11 + $0xe8] sm:$0xff]
        %v1748 = vld [vmem:[#allocation11 + $0xf0] sm:$0xff]
        %v1749 = vld [vmem:[#allocation11 + $0xf8] sm:$0xff]
        %v1750 = vld [vmem:[%s10] sm:$0x3]
        %v1752 = vlaneseq
        %v1753 = vshrl.u32 %v1752, 7
        %v1754 = vsub.s32 0, %v1753
        %v1755 = vrot.slane %v1750, %v1754
        %v1756 = vlaneseq
        %v1757 = vshrl.u32 %v1756, 7
        %v1758 = vsub.s32 1, %v1757
        %v1759 = vrot.slane %v1750, %v1758
        %v1794 = vunpack.c.l.b16 %v1718
        %v1795 = vunpack.c.h.b16 %v1718
        %v1796 = vunpack.c.l.b16 %v1719
        %v1797 = vunpack.c.h.b16 %v1719
        %v1798 = vunpack.c.l.b16 %v1720
        %v1799 = vunpack.c.h.b16 %v1720
        %v1800 = vunpack.c.l.b16 %v1721
        %v1801 = vunpack.c.h.b16 %v1721
        %v1802 = vunpack.c.l.b16 %v1722
        %v1803 = vunpack.c.h.b16 %v1722
        %v1804 = vunpack.c.l.b16 %v1723
        %v1805 = vunpack.c.h.b16 %v1723
        %v1806 = vunpack.c.l.b16 %v1724
        %v1807 = vunpack.c.h.b16 %v1724
        %v1808 = vunpack.c.l.b16 %v1725
        %v1809 = vunpack.c.h.b16 %v1725
        %v1810 = vunpack.c.l.b16 %v1726
        %v1811 = vunpack.c.h.b16 %v1726
        %v1812 = vunpack.c.l.b16 %v1727
        %v1813 = vunpack.c.h.b16 %v1727
        %v1814 = vunpack.c.l.b16 %v1728
        %v1815 = vunpack.c.h.b16 %v1728
        %v1816 = vunpack.c.l.b16 %v1729
        %v1817 = vunpack.c.h.b16 %v1729
        %v1818 = vunpack.c.l.b16 %v1730
        %v1819 = vunpack.c.h.b16 %v1730
        %v1820 = vunpack.c.l.b16 %v1731
        %v1821 = vunpack.c.h.b16 %v1731
        %v1822 = vunpack.c.l.b16 %v1732
        %v1823 = vunpack.c.h.b16 %v1732
        %v1824 = vunpack.c.l.b16 %v1733
        %v1825 = vunpack.c.h.b16 %v1733
        %v1826 = vunpack.c.l.b16 %v1734
        %v1827 = vunpack.c.h.b16 %v1734
        %v1828 = vunpack.c.l.b16 %v1735
        %v1829 = vunpack.c.h.b16 %v1735
        %v1830 = vunpack.c.l.b16 %v1736
        %v1831 = vunpack.c.h.b16 %v1736
        %v1832 = vunpack.c.l.b16 %v1737
        %v1833 = vunpack.c.h.b16 %v1737
        %v1834 = vunpack.c.l.b16 %v1738
        %v1835 = vunpack.c.h.b16 %v1738
        %v1836 = vunpack.c.l.b16 %v1739
        %v1837 = vunpack.c.h.b16 %v1739
        %v1838 = vunpack.c.l.b16 %v1740
        %v1839 = vunpack.c.h.b16 %v1740
        %v1840 = vunpack.c.l.b16 %v1741
        %v1841 = vunpack.c.h.b16 %v1741
        %v1842 = vunpack.c.l.b16 %v1742
        %v1843 = vunpack.c.h.b16 %v1742
        %v1844 = vunpack.c.l.b16 %v1743
        %v1845 = vunpack.c.h.b16 %v1743
        %v1846 = vunpack.c.l.b16 %v1744
        %v1847 = vunpack.c.h.b16 %v1744
        %v1848 = vunpack.c.l.b16 %v1745
        %v1849 = vunpack.c.h.b16 %v1745
        %v1850 = vunpack.c.l.b16 %v1746
        %v1851 = vunpack.c.h.b16 %v1746
        %v1852 = vunpack.c.l.b16 %v1747
        %v1853 = vunpack.c.h.b16 %v1747
        %v1854 = vunpack.c.l.b16 %v1748
        %v1855 = vunpack.c.h.b16 %v1748
        %v1856 = vunpack.c.l.b16 %v1749
        %v1857 = vunpack.c.h.b16 %v1749
        %v1858 = vpack.c.b16 %v1796, %v1794
        %v1859 = vpack.c.b16 %v1797, %v1795
        %v1860 = vpack.c.b16 %v1800, %v1798
        %v1861 = vpack.c.b16 %v1801, %v1799
        %v1862 = vpack.c.b16 %v1804, %v1802
        %v1863 = vpack.c.b16 %v1805, %v1803
        %v1864 = vpack.c.b16 %v1808, %v1806
        %v1865 = vpack.c.b16 %v1809, %v1807
        %v1866 = vpack.c.b16 %v1812, %v1810
        %v1867 = vpack.c.b16 %v1813, %v1811
        %v1868 = vpack.c.b16 %v1816, %v1814
        %v1869 = vpack.c.b16 %v1817, %v1815
        %v1870 = vpack.c.b16 %v1820, %v1818
        %v1871 = vpack.c.b16 %v1821, %v1819
        %v1872 = vpack.c.b16 %v1824, %v1822
        %v1873 = vpack.c.b16 %v1825, %v1823
        %v1874 = vpack.c.b16 %v1828, %v1826
        %v1875 = vpack.c.b16 %v1829, %v1827
        %v1876 = vpack.c.b16 %v1832, %v1830
        %v1877 = vpack.c.b16 %v1833, %v1831
        %v1878 = vpack.c.b16 %v1836, %v1834
        %v1879 = vpack.c.b16 %v1837, %v1835
        %v1880 = vpack.c.b16 %v1840, %v1838
        %v1881 = vpack.c.b16 %v1841, %v1839
        %v1882 = vpack.c.b16 %v1844, %v1842
        %v1883 = vpack.c.b16 %v1845, %v1843
        %v1884 = vpack.c.b16 %v1848, %v1846
        %v1885 = vpack.c.b16 %v1849, %v1847
        %v1886 = vpack.c.b16 %v1852, %v1850
        %v1887 = vpack.c.b16 %v1853, %v1851
        %v1888 = vpack.c.b16 %v1856, %v1854
        %v1889 = vpack.c.b16 %v1857, %v1855
        %1922 = vmatprep.subr.bf16.mxu0 %v1859
        %1923 = vmatpush1.bf16.msra.mxu0 %v1858
        %1924 = vmatprep.subr.bf16.mxu0 %v1861
        %1925 = vmatpush1.bf16.msra.mxu0 %v1860
        %1926 = vmatprep.subr.bf16.mxu0 %v1863
        %1927 = vmatpush1.bf16.msra.mxu0 %v1862
        %1928 = vmatprep.subr.bf16.mxu0 %v1865
        %1929 = vmatpush1.bf16.msra.mxu0 %v1864
        %1930 = vmatprep.subr.bf16.mxu0 %v1867
        %1931 = vmatpush1.bf16.msra.mxu0 %v1866
        %1932 = vmatprep.subr.bf16.mxu0 %v1869
        %1933 = vmatpush1.bf16.msra.mxu0 %v1868
        %1934 = vmatprep.subr.bf16.mxu0 %v1871
        %1935 = vmatpush1.bf16.msra.mxu0 %v1870
        %1936 = vmatprep.subr.bf16.mxu0 %v1873
        %1937 = vmatpush1.bf16.msra.mxu0 %v1872
        %1938 = vmatprep.subr.bf16.mxu0 %v1875
        %1939 = vmatpush1.bf16.msra.mxu0 %v1874
        %1940 = vmatprep.subr.bf16.mxu0 %v1877
        %1941 = vmatpush1.bf16.msra.mxu0 %v1876
        %1942 = vmatprep.subr.bf16.mxu0 %v1879
        %1943 = vmatpush1.bf16.msra.mxu0 %v1878
        %1944 = vmatprep.subr.bf16.mxu0 %v1881
        %1945 = vmatpush1.bf16.msra.mxu0 %v1880
        %1946 = vmatprep.subr.bf16.mxu0 %v1883
        %1947 = vmatpush1.bf16.msra.mxu0 %v1882
        %1948 = vmatprep.subr.bf16.mxu0 %v1885
        %1949 = vmatpush1.bf16.msra.mxu0 %v1884
        %1950 = vmatprep.subr.bf16.mxu0 %v1887
        %1951 = vmatpush1.bf16.msra.mxu0 %v1886
        %1952 = vmatprep.subr.bf16.mxu0 %v1889
        %1953 = vmatpush1.bf16.msra.mxu0 %v1888
        %1954 = vmatprep.mubr.bf16.mxu0 %v1716
        %1955 = vmatmul.mubr.bf16.gmra.mrb[0].mxu0 %v1714
        %v1956 = vpop.f32.mrb[0].mxu0
        %v1957 = vadd.f32 %v1755, %v1956
        %v1958 = vpop.f32.mrb[0].mxu0
        %v1959 = vadd.f32 %v1759, %v1958
        %v1960 = vpop.f32.mrb[0].mxu0
        %v1961 = vadd.f32 %v1755, %v1960
        %v1962 = vpop.f32.mrb[0].mxu0
        %v1963 = vadd.f32 %v1759, %v1962
        %1964 = vmatprep.mubr.bf16.mxu0 %v1717
        %1965 = vmatmul.mubr.bf16.gmra.mrb[0].mxu0 %v1715
        %v1966 = vpop.f32.mrb[0].mxu0
        %v1967 = vadd.f32 %v1755, %v1966
        %v1968 = vpop.f32.mrb[0].mxu0
        %v1969 = vadd.f32 %v1759, %v1968
        %v1970 = vpop.f32.mrb[0].mxu0
        %v1971 = vadd.f32 %v1755, %v1970
        %v1972 = vpop.f32.mrb[0].mxu0
        %v1973 = vadd.f32 %v1759, %v1972
        %1974 = vdwg.mxu0
        %v1975 = vmax.f32 %v1957, 0.0
        %v1976 = vmax.f32 %v1961, 0.0
        %v1977 = vmax.f32 %v1967, 0.0
        %v1978 = vmax.f32 %v1971, 0.0
        %v1979 = vrot.slane %v1975, 4
        %v1980 = vrot.slane %v1976, 4
        %v1981 = vrot.slane %v1977, 4
        %v1982 = vrot.slane %v1978, 4
        %v1983 = vsel %vm1693, %v1981, %v1982
        %v1984 = vsel %vm1693, %v1980, %v1981
        %v1985 = vsel %vm1693, %v1979, %v1980
        %v1986 = vsel %vm1693, %v1982, %v1979
        %v1987 = vsel %vm1706, %v1986, 0.0
        %v1988 = vsel %vm1707, %v1985, 0.0
        %v1989 = vsel %vm1708, %v1984, 0.0
        %v1990 = vsel %vm1709, %v1983, 0.0
        %v1991 = vpack.c.bf16 %v1988, %v1987
        %v1992 = vpack.c.bf16 %v1990, %v1989
        %v1993 = vpack.c.bf16 %v1976, %v1975
        %v1994 = vpack.c.bf16 %v1978, %v1977
        %v1995 = vld [vmem:[#allocation13] sm:$0xf]
        %v1996 = vld [vmem:[#allocation13 + $0x4] sm:$0xf]
        %v1997 = vld [vmem:[#allocation13 + $0x8] sm:$0xf]
        %v1998 = vld [vmem:[#allocation13 + $0xc] sm:$0xf]
        %v1999 = vld [vmem:[#allocation13 + $0x10] sm:$0xf]
        %v2000 = vld [vmem:[#allocation13 + $0x14] sm:$0xf]
        %v2001 = vld [vmem:[#allocation13 + $0x18] sm:$0xf]
        %v2002 = vld [vmem:[#allocation13 + $0x1c] sm:$0xf]
        %v2003 = vld [vmem:[#allocation13 + $0x20] sm:$0xf]
        %v2004 = vld [vmem:[#allocation13 + $0x24] sm:$0xf]
        %v2005 = vld [vmem:[#allocation13 + $0x28] sm:$0xf]
        %v2006 = vld [vmem:[#allocation13 + $0x2c] sm:$0xf]
        %v2007 = vld [vmem:[#allocation13 + $0x30] sm:$0xf]
        %v2008 = vld [vmem:[#allocation13 + $0x34] sm:$0xf]
        %v2009 = vld [vmem:[#allocation13 + $0x38] sm:$0xf]
        %v2010 = vld [vmem:[#allocation13 + $0x3c] sm:$0xf]
        %v2011 = vld [vmem:[#allocation13 + $0x40] sm:$0xf]
        %v2012 = vld [vmem:[#allocation13 + $0x44] sm:$0xf]
        %v2013 = vld [vmem:[#allocation13 + $0x48] sm:$0xf]
        %v2014 = vld [vmem:[#allocation13 + $0x4c] sm:$0xf]
        %v2015 = vld [vmem:[#allocation13 + $0x50] sm:$0xf]
        %v2016 = vld [vmem:[#allocation13 + $0x54] sm:$0xf]
        %v2017 = vld [vmem:[#allocation13 + $0x58] sm:$0xf]
        %v2018 = vld [vmem:[#allocation13 + $0x5c] sm:$0xf]
        %v2019 = vld [vmem:[#allocation13 + $0x60] sm:$0xf]
        %v2020 = vld [vmem:[#allocation13 + $0x64] sm:$0xf]
        %v2021 = vld [vmem:[#allocation13 + $0x68] sm:$0xf]
        %v2022 = vld [vmem:[#allocation13 + $0x6c] sm:$0xf]
        %v2023 = vld [vmem:[#allocation13 + $0x70] sm:$0xf]
        %v2024 = vld [vmem:[#allocation13 + $0x74] sm:$0xf]
        %v2025 = vld [vmem:[#allocation13 + $0x78] sm:$0xf]
        %v2026 = vld [vmem:[#allocation13 + $0x7c] sm:$0xf]
        %v2027 = vld [vmem:[%s12] sm:$0x1]
        %v2029 = vlaneseq
        %v2030 = vshrl.u32 %v2029, 7
        %v2031 = vsub.s32 0, %v2030
        %v2032 = vrot.slane %v2027, %v2031
        %v2066 = vunpack.c.l.b16 %v1995
        %v2067 = vunpack.c.l.b16 %v1996
        %v2068 = vunpack.c.l.b16 %v1997
        %v2069 = vunpack.c.l.b16 %v1998
        %v2070 = vunpack.c.l.b16 %v1999
        %v2071 = vunpack.c.l.b16 %v2000
        %v2072 = vunpack.c.l.b16 %v2001
        %v2073 = vunpack.c.l.b16 %v2002
        %v2074 = vunpack.c.l.b16 %v2003
        %v2075 = vunpack.c.l.b16 %v2004
        %v2076 = vunpack.c.l.b16 %v2005
        %v2077 = vunpack.c.l.b16 %v2006
        %v2078 = vunpack.c.l.b16 %v2007
        %v2079 = vunpack.c.l.b16 %v2008
        %v2080 = vunpack.c.l.b16 %v2009
        %v2081 = vunpack.c.l.b16 %v2010
        %v2082 = vunpack.c.l.b16 %v2011
        %v2083 = vunpack.c.l.b16 %v2012
        %v2084 = vunpack.c.l.b16 %v2013
        %v2085 = vunpack.c.l.b16 %v2014
        %v2086 = vunpack.c.l.b16 %v2015
        %v2087 = vunpack.c.l.b16 %v2016
        %v2088 = vunpack.c.l.b16 %v2017
        %v2089 = vunpack.c.l.b16 %v2018
        %v2090 = vunpack.c.l.b16 %v2019
        %v2091 = vunpack.c.l.b16 %v2020
        %v2092 = vunpack.c.l.b16 %v2021
        %v2093 = vunpack.c.l.b16 %v2022
        %v2094 = vunpack.c.l.b16 %v2023
        %v2095 = vunpack.c.l.b16 %v2024
        %v2096 = vunpack.c.l.b16 %v2025
        %v2097 = vunpack.c.l.b16 %v2026
        %v2098 = vpack.c.b16 %v2067, %v2066
        %v2099 = vpack.c.b16 %v2069, %v2068
        %v2100 = vpack.c.b16 %v2071, %v2070
        %v2101 = vpack.c.b16 %v2073, %v2072
        %v2102 = vpack.c.b16 %v2075, %v2074
        %v2103 = vpack.c.b16 %v2077, %v2076
        %v2104 = vpack.c.b16 %v2079, %v2078
        %v2105 = vpack.c.b16 %v2081, %v2080
        %v2106 = vpack.c.b16 %v2083, %v2082
        %v2107 = vpack.c.b16 %v2085, %v2084
        %v2108 = vpack.c.b16 %v2087, %v2086
        %v2109 = vpack.c.b16 %v2089, %v2088
        %v2110 = vpack.c.b16 %v2091, %v2090
        %v2111 = vpack.c.b16 %v2093, %v2092
        %v2112 = vpack.c.b16 %v2095, %v2094
        %v2113 = vpack.c.b16 %v2097, %v2096
        %2130 = vmatprep.subr.bf16.mxu0 0
        %2131 = vmatpush1.bf16.msra.mxu0 %v2098
        %2132 = vmatprep.subr.bf16.mxu0 0
        %2133 = vmatpush1.bf16.msra.mxu0 %v2099
        %2134 = vmatprep.subr.bf16.mxu0 0
        %2135 = vmatpush1.bf16.msra.mxu0 %v2100
        %2136 = vmatprep.subr.bf16.mxu0 0
        %2137 = vmatpush1.bf16.msra.mxu0 %v2101
        %2138 = vmatprep.subr.bf16.mxu0 0
        %2139 = vmatpush1.bf16.msra.mxu0 %v2102
        %2140 = vmatprep.subr.bf16.mxu0 0
        %2141 = vmatpush1.bf16.msra.mxu0 %v2103
        %2142 = vmatprep.subr.bf16.mxu0 0
        %2143 = vmatpush1.bf16.msra.mxu0 %v2104
        %2144 = vmatprep.subr.bf16.mxu0 0
        %2145 = vmatpush1.bf16.msra.mxu0 %v2105
        %2146 = vmatprep.subr.bf16.mxu0 0
        %2147 = vmatpush1.bf16.msra.mxu0 %v2106
        %2148 = vmatprep.subr.bf16.mxu0 0
        %2149 = vmatpush1.bf16.msra.mxu0 %v2107
        %2150 = vmatprep.subr.bf16.mxu0 0
        %2151 = vmatpush1.bf16.msra.mxu0 %v2108
        %2152 = vmatprep.subr.bf16.mxu0 0
        %2153 = vmatpush1.bf16.msra.mxu0 %v2109
        %2154 = vmatprep.subr.bf16.mxu0 0
        %2155 = vmatpush1.bf16.msra.mxu0 %v2110
        %2156 = vmatprep.subr.bf16.mxu0 0
        %2157 = vmatpush1.bf16.msra.mxu0 %v2111
        %2158 = vmatprep.subr.bf16.mxu0 0
        %2159 = vmatpush1.bf16.msra.mxu0 %v2112
        %2160 = vmatprep.subr.bf16.mxu0 0
        %2161 = vmatpush1.bf16.msra.mxu0 %v2113
        %2162 = vmatprep.mubr.bf16.mxu0 %v1993
        %2163 = vmatmul.mubr.bf16.gmra.mrb[0].mxu0 %v1991
        %v2164 = vpop.f32.mrb[0].mxu0
        %v2165 = vadd.f32 %v2032, %v2164
        %v2166 = vpop.f32.mrb[0].mxu0
        %v2167 = vpop.f32.mrb[0].mxu0
        %v2168 = vadd.f32 %v2032, %v2167
        %v2169 = vpop.f32.mrb[0].mxu0
        %2170 = vmatprep.mubr.bf16.mxu0 %v1994
        %2171 = vmatmul.mubr.bf16.gmra.mrb[0].mxu0 %v1992
        %v2172 = vpop.f32.mrb[0].mxu0
        %v2173 = vadd.f32 %v2032, %v2172
        %v2174 = vpop.f32.mrb[0].mxu0
        %v2175 = vpop.f32.mrb[0].mxu0
        %v2176 = vadd.f32 %v2032, %v2175
        %v2177 = vpop.f32.mrb[0].mxu0
        %2178 = vdwg.mxu0
        %v2179 = vmax.f32 %v2165, 0.0
        %v2180 = vmax.f32 %v2168, 0.0
        %v2181 = vmax.f32 %v2173, 0.0
        %v2182 = vmax.f32 %v2176, 0.0
        %v2183 = vadd.f32 %v2179, %v1959
        %v2184 = vadd.f32 %v2180, %v1963
        %v2185 = vadd.f32 %v2181, %v1969
        %v2186 = vadd.f32 %v2182, %v1973
        %v2187 = vmax.f32 %v2183, 0.0
        %v2188 = vmax.f32 %v2184, 0.0
        %v2189 = vmax.f32 %v2185, 0.0
        %v2190 = vmax.f32 %v2186, 0.0
        %vm2191 = vcmp.ge.s32.totalorder %v744, 8
        %vm2192 = vcmp.ge.s32.totalorder %v745, 8
        %vm2193 = vcmp.ge.s32.totalorder %v746, 8
        %vm2194 = vcmp.ge.s32.totalorder %v747, 8
        %v2195 = vsel %vm2191, 1, 0
        %v2196 = vsel %vm2192, 1, 0
        %v2197 = vsel %vm2193, 1, 0
        %v2198 = vsel %vm2194, 1, 0
        %vm2199 = vcmp.eq.s32.totalorder %v2195, 1
        %vm2200 = vcmp.eq.s32.totalorder %v2196, 1
        %vm2201 = vcmp.eq.s32.totalorder %v2197, 1
        %vm2202 = vcmp.eq.s32.totalorder %v2198, 1
        %v2203 = vsel %vm2199, %v2190, 0.0
        %v2204 = vsel %vm2200, %v2187, 0.0
        %v2205 = vsel %vm2201, %v2188, 0.0
        %v2206 = vsel %vm2202, %v2189, 0.0
        %v2207 = vpack.c.bf16 %v2204, %v2203
        %v2208 = vpack.c.bf16 %v2206, %v2205
        %v2209 = vpack.c.bf16 %v2188, %v2187
        %v2210 = vpack.c.bf16 %v2190, %v2189
        %v2211 = vld [vmem:[#allocation14] sm:$0xf]
        %v2212 = vld [vmem:[#allocation14 + $0x4] sm:$0xf]
        %v2213 = vld [vmem:[#allocation14 + $0x8] sm:$0xf]
        %v2214 = vld [vmem:[#allocation14 + $0xc] sm:$0xf]
        %v2215 = vld [vmem:[#allocation14 + $0x10] sm:$0xf]
        %v2216 = vld [vmem:[#allocation14 + $0x14] sm:$0xf]
        %v2217 = vld [vmem:[#allocation14 + $0x18] sm:$0xf]
        %v2218 = vld [vmem:[#allocation14 + $0x1c] sm:$0xf]
        %v2219 = vld [vmem:[#allocation14 + $0x20] sm:$0xf]
        %v2220 = vld [vmem:[#allocation14 + $0x24] sm:$0xf]
        %v2221 = vld [vmem:[#allocation14 + $0x28] sm:$0xf]
        %v2222 = vld [vmem:[#allocation14 + $0x2c] sm:$0xf]
        %v2223 = vld [vmem:[#allocation14 + $0x30] sm:$0xf]
        %v2224 = vld [vmem:[#allocation14 + $0x34] sm:$0xf]
        %v2225 = vld [vmem:[#allocation14 + $0x38] sm:$0xf]
        %v2226 = vld [vmem:[#allocation14 + $0x3c] sm:$0xf]
        %v2227 = vld [vmem:[#allocation14 + $0x40] sm:$0xf]
        %v2228 = vld [vmem:[#allocation14 + $0x44] sm:$0xf]
        %v2229 = vld [vmem:[#allocation14 + $0x48] sm:$0xf]
        %v2230 = vld [vmem:[#allocation14 + $0x4c] sm:$0xf]
        %v2231 = vld [vmem:[#allocation14 + $0x50] sm:$0xf]
        %v2232 = vld [vmem:[#allocation14 + $0x54] sm:$0xf]
        %v2233 = vld [vmem:[#allocation14 + $0x58] sm:$0xf]
        %v2234 = vld [vmem:[#allocation14 + $0x5c] sm:$0xf]
        %v2235 = vld [vmem:[#allocation14 + $0x60] sm:$0xf]
        %v2236 = vld [vmem:[#allocation14 + $0x64] sm:$0xf]
        %v2237 = vld [vmem:[#allocation14 + $0x68] sm:$0xf]
        %v2238 = vld [vmem:[#allocation14 + $0x6c] sm:$0xf]
        %v2239 = vld [vmem:[#allocation14 + $0x70] sm:$0xf]
        %v2240 = vld [vmem:[#allocation14 + $0x74] sm:$0xf]
        %v2241 = vld [vmem:[#allocation14 + $0x78] sm:$0xf]
        %v2242 = vld [vmem:[#allocation14 + $0x7c] sm:$0xf]
        %v2243 = vld [vmem:[%s14] sm:$0x1]
        %v2245 = vlaneseq
        %v2246 = vshrl.u32 %v2245, 7
        %v2247 = vsub.s32 0, %v2246
        %v2248 = vrot.slane %v2243, %v2247
        %v2282 = vunpack.c.l.b16 %v2211
        %v2283 = vunpack.c.l.b16 %v2212
        %v2284 = vunpack.c.l.b16 %v2213
        %v2285 = vunpack.c.l.b16 %v2214
        %v2286 = vunpack.c.l.b16 %v2215
        %v2287 = vunpack.c.l.b16 %v2216
        %v2288 = vunpack.c.l.b16 %v2217
        %v2289 = vunpack.c.l.b16 %v2218
        %v2290 = vunpack.c.l.b16 %v2219
        %v2291 = vunpack.c.l.b16 %v2220
        %v2292 = vunpack.c.l.b16 %v2221
        %v2293 = vunpack.c.l.b16 %v2222
        %v2294 = vunpack.c.l.b16 %v2223
        %v2295 = vunpack.c.l.b16 %v2224
        %v2296 = vunpack.c.l.b16 %v2225
        %v2297 = vunpack.c.l.b16 %v2226
        %v2298 = vunpack.c.l.b16 %v2227
        %v2299 = vunpack.c.l.b16 %v2228
        %v2300 = vunpack.c.l.b16 %v2229
        %v2301 = vunpack.c.l.b16 %v2230
        %v2302 = vunpack.c.l.b16 %v2231
        %v2303 = vunpack.c.l.b16 %v2232
        %v2304 = vunpack.c.l.b16 %v2233
        %v2305 = vunpack.c.l.b16 %v2234
        %v2306 = vunpack.c.l.b16 %v2235
        %v2307 = vunpack.c.l.b16 %v2236
        %v2308 = vunpack.c.l.b16 %v2237
        %v2309 = vunpack.c.l.b16 %v2238
        %v2310 = vunpack.c.l.b16 %v2239
        %v2311 = vunpack.c.l.b16 %v2240
        %v2312 = vunpack.c.l.b16 %v2241
        %v2313 = vunpack.c.l.b16 %v2242
        %v2314 = vpack.c.b16 %v2283, %v2282
        %v2315 = vpack.c.b16 %v2285, %v2284
        %v2316 = vpack.c.b16 %v2287, %v2286
        %v2317 = vpack.c.b16 %v2289, %v2288
        %v2318 = vpack.c.b16 %v2291, %v2290
        %v2319 = vpack.c.b16 %v2293, %v2292
        %v2320 = vpack.c.b16 %v2295, %v2294
        %v2321 = vpack.c.b16 %v2297, %v2296
        %v2322 = vpack.c.b16 %v2299, %v2298
        %v2323 = vpack.c.b16 %v2301, %v2300
        %v2324 = vpack.c.b16 %v2303, %v2302
        %v2325 = vpack.c.b16 %v2305, %v2304
        %v2326 = vpack.c.b16 %v2307, %v2306
        %v2327 = vpack.c.b16 %v2309, %v2308
        %v2328 = vpack.c.b16 %v2311, %v2310
        %v2329 = vpack.c.b16 %v2313, %v2312
        %2346 = vmatprep.subr.bf16.mxu0 0
        %2347 = vmatpush1.bf16.msra.mxu0 %v2314
        %2348 = vmatprep.subr.bf16.mxu0 0
        %2349 = vmatpush1.bf16.msra.mxu0 %v2315
        %2350 = vmatprep.subr.bf16.mxu0 0
        %2351 = vmatpush1.bf16.msra.mxu0 %v2316
        %2352 = vmatprep.subr.bf16.mxu0 0
        %2353 = vmatpush1.bf16.msra.mxu0 %v2317
        %2354 = vmatprep.subr.bf16.mxu0 0
        %2355 = vmatpush1.bf16.msra.mxu0 %v2318
        %2356 = vmatprep.subr.bf16.mxu0 0
        %2357 = vmatpush1.bf16.msra.mxu0 %v2319
        %2358 = vmatprep.subr.bf16.mxu0 0
        %2359 = vmatpush1.bf16.msra.mxu0 %v2320
        %2360 = vmatprep.subr.bf16.mxu0 0
        %2361 = vmatpush1.bf16.msra.mxu0 %v2321
        %2362 = vmatprep.subr.bf16.mxu0 0
        %2363 = vmatpush1.bf16.msra.mxu0 %v2322
        %2364 = vmatprep.subr.bf16.mxu0 0
        %2365 = vmatpush1.bf16.msra.mxu0 %v2323
        %2366 = vmatprep.subr.bf16.mxu0 0
        %2367 = vmatpush1.bf16.msra.mxu0 %v2324
        %2368 = vmatprep.subr.bf16.mxu0 0
        %2369 = vmatpush1.bf16.msra.mxu0 %v2325
        %2370 = vmatprep.subr.bf16.mxu0 0
        %2371 = vmatpush1.bf16.msra.mxu0 %v2326
        %2372 = vmatprep.subr.bf16.mxu0 0
        %2373 = vmatpush1.bf16.msra.mxu0 %v2327
        %2374 = vmatprep.subr.bf16.mxu0 0
        %2375 = vmatpush1.bf16.msra.mxu0 %v2328
        %2376 = vmatprep.subr.bf16.mxu0 0
        %2377 = vmatpush1.bf16.msra.mxu0 %v2329
        %2378 = vmatprep.mubr.bf16.mxu0 %v2209
        %2379 = vmatmul.mubr.bf16.gmra.mrb[0].mxu0 %v2207
        %v2380 = vpop.f32.mrb[0].mxu0
        %v2381 = vadd.f32 %v2248, %v2380
        %v2382 = vpop.f32.mrb[0].mxu0
        %v2383 = vpop.f32.mrb[0].mxu0
        %v2384 = vadd.f32 %v2248, %v2383
        %v2385 = vpop.f32.mrb[0].mxu0
        %2386 = vmatprep.mubr.bf16.mxu0 %v2210
        %2387 = vmatmul.mubr.bf16.gmra.mrb[0].mxu0 %v2208
        %v2388 = vpop.f32.mrb[0].mxu0
        %v2389 = vadd.f32 %v2248, %v2388
        %v2390 = vpop.f32.mrb[0].mxu0
        %v2391 = vpop.f32.mrb[0].mxu0
        %v2392 = vadd.f32 %v2248, %v2391
        %v2393 = vpop.f32.mrb[0].mxu0
        %2394 = vdwg.mxu0
        %v2395 = vmax.f32 %v2381, 0.0
        %v2396 = vmax.f32 %v2384, 0.0
        %v2397 = vmax.f32 %v2389, 0.0
        %v2398 = vmax.f32 %v2392, 0.0
        %v2399 = vsel %vm2199, %v2398, 0.0
        %v2400 = vsel %vm2200, %v2395, 0.0
        %v2401 = vsel %vm2201, %v2396, 0.0
        %v2402 = vsel %vm2202, %v2397, 0.0
        %v2403 = vpack.c.bf16 %v2400, %v2399
        %v2404 = vpack.c.bf16 %v2402, %v2401
        %v2405 = vpack.c.bf16 %v2396, %v2395
        %v2406 = vpack.c.bf16 %v2398, %v2397
        %v2407 = vld [vmem:[#allocation16] sm:$0xf]
        %v2408 = vld [vmem:[#allocation16 + $0x4] sm:$0xf]
        %v2409 = vld [vmem:[#allocation16 + $0x8] sm:$0xf]
        %v2410 = vld [vmem:[#allocation16 + $0xc] sm:$0xf]
        %v2411 = vld [vmem:[#allocation16 + $0x10] sm:$0xf]
        %v2412 = vld [vmem:[#allocation16 + $0x14] sm:$0xf]
        %v2413 = vld [vmem:[#allocation16 + $0x18] sm:$0xf]
        %v2414 = vld [vmem:[#allocation16 + $0x1c] sm:$0xf]
        %v2415 = vld [vmem:[#allocation16 + $0x20] sm:$0xf]
        %v2416 = vld [vmem:[#allocation16 + $0x24] sm:$0xf]
        %v2417 = vld [vmem:[#allocation16 + $0x28] sm:$0xf]
        %v2418 = vld [vmem:[#allocation16 + $0x2c] sm:$0xf]
        %v2419 = vld [vmem:[#allocation16 + $0x30] sm:$0xf]
        %v2420 = vld [vmem:[#allocation16 + $0x34] sm:$0xf]
        %v2421 = vld [vmem:[#allocation16 + $0x38] sm:$0xf]
        %v2422 = vld [vmem:[#allocation16 + $0x3c] sm:$0xf]
        %v2423 = vld [vmem:[#allocation16 + $0x40] sm:$0xf]
        %v2424 = vld [vmem:[#allocation16 + $0x44] sm:$0xf]
        %v2425 = vld [vmem:[#allocation16 + $0x48] sm:$0xf]
        %v2426 = vld [vmem:[#allocation16 + $0x4c] sm:$0xf]
        %v2427 = vld [vmem:[#allocation16 + $0x50] sm:$0xf]
        %v2428 = vld [vmem:[#allocation16 + $0x54] sm:$0xf]
        %v2429 = vld [vmem:[#allocation16 + $0x58] sm:$0xf]
        %v2430 = vld [vmem:[#allocation16 + $0x5c] sm:$0xf]
        %v2431 = vld [vmem:[#allocation16 + $0x60] sm:$0xf]
        %v2432 = vld [vmem:[#allocation16 + $0x64] sm:$0xf]
        %v2433 = vld [vmem:[#allocation16 + $0x68] sm:$0xf]
        %v2434 = vld [vmem:[#allocation16 + $0x6c] sm:$0xf]
        %v2435 = vld [vmem:[#allocation16 + $0x70] sm:$0xf]
        %v2436 = vld [vmem:[#allocation16 + $0x74] sm:$0xf]
        %v2437 = vld [vmem:[#allocation16 + $0x78] sm:$0xf]
        %v2438 = vld [vmem:[#allocation16 + $0x7c] sm:$0xf]
        %v2439 = vld [vmem:[%s16] sm:$0x1]
        %v2441 = vlaneseq
        %v2442 = vshrl.u32 %v2441, 7
        %v2443 = vsub.s32 0, %v2442
        %v2444 = vrot.slane %v2439, %v2443
        %v2478 = vunpack.c.l.b16 %v2407
        %v2479 = vunpack.c.l.b16 %v2408
        %v2480 = vunpack.c.l.b16 %v2409
        %v2481 = vunpack.c.l.b16 %v2410
        %v2482 = vunpack.c.l.b16 %v2411
        %v2483 = vunpack.c.l.b16 %v2412
        %v2484 = vunpack.c.l.b16 %v2413
        %v2485 = vunpack.c.l.b16 %v2414
        %v2486 = vunpack.c.l.b16 %v2415
        %v2487 = vunpack.c.l.b16 %v2416
        %v2488 = vunpack.c.l.b16 %v2417
        %v2489 = vunpack.c.l.b16 %v2418
        %v2490 = vunpack.c.l.b16 %v2419
        %v2491 = vunpack.c.l.b16 %v2420
        %v2492 = vunpack.c.l.b16 %v2421
        %v2493 = vunpack.c.l.b16 %v2422
        %v2494 = vunpack.c.l.b16 %v2423
        %v2495 = vunpack.c.l.b16 %v2424
        %v2496 = vunpack.c.l.b16 %v2425
        %v2497 = vunpack.c.l.b16 %v2426
        %v2498 = vunpack.c.l.b16 %v2427
        %v2499 = vunpack.c.l.b16 %v2428
        %v2500 = vunpack.c.l.b16 %v2429
        %v2501 = vunpack.c.l.b16 %v2430
        %v2502 = vunpack.c.l.b16 %v2431
        %v2503 = vunpack.c.l.b16 %v2432
        %v2504 = vunpack.c.l.b16 %v2433
        %v2505 = vunpack.c.l.b16 %v2434
        %v2506 = vunpack.c.l.b16 %v2435
        %v2507 = vunpack.c.l.b16 %v2436
        %v2508 = vunpack.c.l.b16 %v2437
        %v2509 = vunpack.c.l.b16 %v2438
        %v2510 = vpack.c.b16 %v2479, %v2478
        %v2511 = vpack.c.b16 %v2481, %v2480
        %v2512 = vpack.c.b16 %v2483, %v2482
        %v2513 = vpack.c.b16 %v2485, %v2484
        %v2514 = vpack.c.b16 %v2487, %v2486
        %v2515 = vpack.c.b16 %v2489, %v2488
        %v2516 = vpack.c.b16 %v2491, %v2490
        %v2517 = vpack.c.b16 %v2493, %v2492
        %v2518 = vpack.c.b16 %v2495, %v2494
        %v2519 = vpack.c.b16 %v2497, %v2496
        %v2520 = vpack.c.b16 %v2499, %v2498
        %v2521 = vpack.c.b16 %v2501, %v2500
        %v2522 = vpack.c.b16 %v2503, %v2502
        %v2523 = vpack.c.b16 %v2505, %v2504
        %v2524 = vpack.c.b16 %v2507, %v2506
        %v2525 = vpack.c.b16 %v2509, %v2508
        %2542 = vmatprep.subr.bf16.mxu0 0
        %2543 = vmatpush1.bf16.msra.mxu0 %v2510
        %2544 = vmatprep.subr.bf16.mxu0 0
        %2545 = vmatpush1.bf16.msra.mxu0 %v2511
        %2546 = vmatprep.subr.bf16.mxu0 0
        %2547 = vmatpush1.bf16.msra.mxu0 %v2512
        %2548 = vmatprep.subr.bf16.mxu0 0
        %2549 = vmatpush1.bf16.msra.mxu0 %v2513
        %2550 = vmatprep.subr.bf16.mxu0 0
        %2551 = vmatpush1.bf16.msra.mxu0 %v2514
        %2552 = vmatprep.subr.bf16.mxu0 0
        %2553 = vmatpush1.bf16.msra.mxu0 %v2515
        %2554 = vmatprep.subr.bf16.mxu0 0
        %2555 = vmatpush1.bf16.msra.mxu0 %v2516
        %2556 = vmatprep.subr.bf16.mxu0 0
        %2557 = vmatpush1.bf16.msra.mxu0 %v2517
        %2558 = vmatprep.subr.bf16.mxu0 0
        %2559 = vmatpush1.bf16.msra.mxu0 %v2518
        %2560 = vmatprep.subr.bf16.mxu0 0
        %2561 = vmatpush1.bf16.msra.mxu0 %v2519
        %2562 = vmatprep.subr.bf16.mxu0 0
        %2563 = vmatpush1.bf16.msra.mxu0 %v2520
        %2564 = vmatprep.subr.bf16.mxu0 0
        %2565 = vmatpush1.bf16.msra.mxu0 %v2521
        %2566 = vmatprep.subr.bf16.mxu0 0
        %2567 = vmatpush1.bf16.msra.mxu0 %v2522
        %2568 = vmatprep.subr.bf16.mxu0 0
        %2569 = vmatpush1.bf16.msra.mxu0 %v2523
        %2570 = vmatprep.subr.bf16.mxu0 0
        %2571 = vmatpush1.bf16.msra.mxu0 %v2524
        %2572 = vmatprep.subr.bf16.mxu0 0
        %2573 = vmatpush1.bf16.msra.mxu0 %v2525
        %2574 = vmatprep.mubr.bf16.mxu0 %v2405
        %2575 = vmatmul.mubr.bf16.gmra.mrb[0].mxu0 %v2403
        %v2576 = vpop.f32.mrb[0].mxu0
        %v2577 = vadd.f32 %v2444, %v2576
        %v2578 = vpop.f32.mrb[0].mxu0
        %v2579 = vpop.f32.mrb[0].mxu0
        %v2580 = vadd.f32 %v2444, %v2579
        %v2581 = vpop.f32.mrb[0].mxu0
        %2582 = vmatprep.mubr.bf16.mxu0 %v2406
        %2583 = vmatmul.mubr.bf16.gmra.mrb[0].mxu0 %v2404
        %v2584 = vpop.f32.mrb[0].mxu0
        %v2585 = vadd.f32 %v2444, %v2584
        %v2586 = vpop.f32.mrb[0].mxu0
        %v2587 = vpop.f32.mrb[0].mxu0
        %v2588 = vadd.f32 %v2444, %v2587
        %v2589 = vpop.f32.mrb[0].mxu0
        %2590 = vdwg.mxu0
        %v2591 = vmax.f32 %v2577, 0.0
        %v2592 = vmax.f32 %v2580, 0.0
        %v2593 = vmax.f32 %v2585, 0.0
        %v2594 = vmax.f32 %v2588, 0.0
        %v2595 = vadd.f32 %v2591, %v2187
        %v2596 = vadd.f32 %v2592, %v2188
        %v2597 = vadd.f32 %v2593, %v2189
        %v2598 = vadd.f32 %v2594, %v2190
        %v2599 = vmax.f32 %v2595, 0.0
        %v2600 = vmax.f32 %v2596, 0.0
        %v2601 = vmax.f32 %v2597, 0.0
        %v2602 = vmax.f32 %v2598, 0.0
        %v2603 = vpack.c.bf16 %v2600, %v2599
        %v2604 = vpack.c.bf16 %v2602, %v2601
        %v2607 = vunpack.c.l.b16 %v2603
        %v2608 = vunpack.c.h.b16 %v2603
        %v2609 = vunpack.c.l.b16 %v2604
        %v2610 = vunpack.c.h.b16 %v2604
        %v2611 = vpack.c.b16 %v2607, %v2607
        %v2612 = vpack.c.b16 %v2608, %v2608
        %v2613 = vpack.c.b16 %v2609, %v2609
        %v2614 = vpack.c.b16 %v2610, %v2610
        %2619 = vst [vmem:[%s683] sm:$0xf] %v2611
        %2620 = vst [vmem:[%s683 + $0x4] sm:$0xf] %v2612
        %2621 = vst [vmem:[%s683 + $0x8] sm:$0xf] %v2613
        %2622 = vst [vmem:[%s683 + $0xc] sm:$0xf] %v2614
        %s2623 = sand.u32 %s408, 1
        %s2624 = scalar_lea.sflag [#allocation4], %s2623
        %s2625 = sand.u32 %s408, 1
        %s2626 = smul.addr %s2625, 16
        %s2627 = scalar_lea.vmem [#allocation17], %s2626
        // Predicated region
        $region125: #{tpu_custom_call.1} parent=87 // pred_check
          %p2628 = pneg %p418
        $region126: #{tpu_custom_call.1} parent=87 // pred_check_branch
          %2630 = sbr.rel (%p2628) target = $region128
        $region127: #{tpu_custom_call.1} parent=87 // pred_region
          %s2631 = smul.u32 2, %s38
          %s2633 = ssub.s32 256, 256
          %2634 = vsyncadd %s2624, %s2633
          %s2635 = smul.addr %s2631, 2
          %s2636 = smul.addr %s2635, 64
          %s2637 = scalar_lea.hbm %s17, %s2636
          %s2638 = sshll.u32 %s2627, 4
          %s2639 = int_to_ptr.vmem [resolvable:$true] %s2638
          %2644 = dma.vmem_to_hbm [thread:$0]  %s2639, 256, %s2637, %s2624, 64, 64, 4
        $region128: #{tpu_custom_call.1} parent=87 // pred_fallthru
          _
      $region88: #{tpu_custom_call.1} parent=5 // pred_fallthru
        _
      %p2645 = scmp.le.s32.totalorder 2, %s33
      // Predicated region
      $region129: #{tpu_custom_call.1} parent=5 // pred_check
        %p2646 = pneg %p2645
      $region130: #{tpu_custom_call.1} parent=5 // pred_check_branch
        %2648 = sbr.rel (%p2646) target = $region132
      $region131: #{tpu_custom_call.1} parent=5 // pred_region
        %s2649 = ssub.s32 %s33, 2
        // Predicated region
        $region133: #{tpu_custom_call.1} parent=131 // pred_check
          %p2650 = pneg %p424
        $region134: #{tpu_custom_call.1} parent=131 // pred_check_branch
          %2652 = sbr.rel (%p2650) target = $region136
        $region135: #{tpu_custom_call.1} parent=131 // pred_region
          %s2653 = sand.u32 %s409, 1
          %s2654 = scalar_lea.sflag [#allocation4], %s2653
          %s2655 = sand.u32 %s409, 1
          %s2656 = smul.addr %s2655, 16
          %s2657 = scalar_lea.vmem [#allocation17], %s2656
          %2658 = dma.done %s2654, 256
        $region136: #{tpu_custom_call.1} parent=131 // pred_fallthru
          _
      $region132: #{tpu_custom_call.1} parent=5 // pred_fallthru
        _
    $region6: #{tpu_custom_call.1} parent=1 // loop_footer
      %s37 = sadd.s32 1, %s33
    $region7: #{tpu_custom_call.1} parent=1 // loop_footer_branch
      %32 = sbr.rel target = $region3
    $region8: #{tpu_custom_call.1} parent=1 // loop_exit
      _
    %2659 = vsyncpa [#allocation3], 1
    %s2660 = scalar_lea.sflag [#allocation3], 1
    %2661 = vsyncpa %s2660, 1
    %2662 = vsyncpa [#allocation6], 1
    %2663 = vsyncpa [#allocation9], 1
    %2664 = vsyncpa [#allocation12], 1
    %2665 = vsyncpa [#allocation15], 1
    %2666 = vsyncpa [#allocation4], 1
    %s2667 = scalar_lea.sflag [#allocation4], 1
    %2668 = vsyncpa %s2667, 1

</llo_original>
